<compile_context>
chip_gen: v6e
topology: v6e:2x2x1
jax: 0.10.0
libtpu: 0.0.40
codegen_flags: <defaults>
</compile_context>

<pallas_src>
import functools
import math

import jax
import jax.numpy as jnp
import numpy as np
from jax.experimental import pallas as pl
from jax.experimental.pallas import tpu as pltpu

NEG_INF = -1e30


# ----------------------------------------------------------------------------
# Fused whole-network kernel
# ----------------------------------------------------------------------------
def _gat_fused_kernel(*refs, layer_cfgs, negative_slope):
    """Full GAT forward, all operands VMEM-resident (small graph).

    refs layout (inputs):
      x_ref      (N, D_in)   f32   node features
      adj_ref    (N, N)      f32   adj[u, v] = 1 iff edge u -> v
      srcoh_ref  (E, N)      f32   one-hot rows of edge source ids
      dstoh_ref  (E, N)      f32   one-hot rows of edge destination ids
      per layer l: w_ref  (D_l, H_l*Dout_l) bf16   fc weight (transposed)
                   wel_ref (D_l, H_l)       f32    folded attn_l projection
                   wer_ref (D_l, H_l)       f32    folded attn_r projection
    outputs:
      logits_ref (N, C)       f32   head-mean of last layer
      att_ref    (E, H_last)  f32   last-layer edge-softmax attention
      f_ref      (N, 1)       f32   ||h||_2 before the last layer
    """
    n_layers = len(layer_cfgs)
    x_ref, adj_ref, srcoh_ref, dstoh_ref = refs[:4]
    lrefs = refs[4:4 + 3 * n_layers]
    logits_ref, att_ref, f_ref = refs[4 + 3 * n_layers:]

    adj = adj_ref[...]
    mask = adj > 0.0
    src_oh = srcoh_ref[...]
    dst_oh = dstoh_ref[...]

    h = x_ref[...]                                        # f32 (N, D_in)

    for l in range(n_layers):                             # static unroll
        num_heads, out_feats, apply_elu, is_last = layer_cfgs[l]
        w_ref, wel_ref, wer_ref = lrefs[3 * l:3 * l + 3]

        if is_last:
            # f = ||h||_2 per node over the flattened hidden features.
            f_ref[...] = jnp.sqrt(jnp.sum(h * h, axis=1, keepdims=True))

        h_bf = h.astype(jnp.bfloat16)

        # feat = fc(h) -> (N, H*D_out); bf16 MXU operands, f32 accumulation.
        z = jax.lax.dot_general(h_bf, w_ref[...], (((1,), (0,)), ((), ())),
                                preferred_element_type=jnp.float32)

        # Folded attention logits (f32 MXU, tiny):
        #   el[u,h] = sum_d z[u,h,d]*attn_l[h,d] = (h @ w_el)[u,h]
        #   er[h,v] = sum_d z[v,h,d]*attn_r[h,d] = (w_er^T @ h^T)[h,v]
        el_nh = jax.lax.dot_general(h, wel_ref[...], (((1,), (0,)), ((), ())),
                                    preferred_element_type=jnp.float32)   # (N, H)
        er_hn = jax.lax.dot_general(wer_ref[...], h, (((0,), (1,)), ((), ())),
                                    preferred_element_type=jnp.float32)   # (H, N)

        outs = []
        att_cols = []
        for hh in range(num_heads):                       # static, small H
            zh = z[:, hh * out_feats:(hh + 1) * out_feats]   # (N, D_out)
            el = el_nh[:, hh:hh + 1]                         # (N, 1)
            er = er_hn[hh:hh + 1, :]                         # (1, N)

            # e[u, v] = leaky_relu(el[u] + er[v]); mask non-edges (f32).
            e = el + er
            e = jnp.where(e >= 0.0, e, negative_slope * e)
            e = jnp.where(mask, e, NEG_INF)

            # edge softmax over incoming edges of destination v (axis 0 = u).
            # Masked entries underflow to exactly 0 in exp; denominator guarded.
            m = jnp.max(e, axis=0, keepdims=True)            # (1, N)
            p = jnp.exp(e - m)                               # (N, N)
            s = jnp.sum(p, axis=0, keepdims=True)            # (1, N)
            inv_s = pl.reciprocal(jnp.maximum(s, 1e-30), approx=True)
            a = p * inv_s                                    # (N, N) f32

            # rst[v, d] = sum_u a[u, v] * zh[u, d]  (bf16 MXU, f32 acc)
            rst = jax.lax.dot_general(
                a.astype(jnp.bfloat16), zh.astype(jnp.bfloat16),
                (((0,), (0,)), ((), ())),
                preferred_element_type=jnp.float32)

            if apply_elu:
                rst = jnp.where(rst > 0.0, rst, jnp.exp(rst) - 1.0)
            outs.append(rst)

            if is_last:
                # Per-edge attention a[src[e], dst[e]] via exact one-hot gather
                # (f32: one-hot selection is exact; avoids (H,N,N) HBM write).
                g = jax.lax.dot_general(src_oh, a, (((1,), (0,)), ((), ())),
                                        preferred_element_type=jnp.float32)  # (E, N)
                att_cols.append(jnp.sum(g * dst_oh, axis=1, keepdims=True))  # (E, 1)

        if is_last:
            # logits = mean over heads (matches logits.mean(1)).
            logits = outs[0]
            for o in outs[1:]:
                logits = logits + o
            logits_ref[...] = logits * (1.0 / float(num_heads))
            att = att_cols[0] if num_heads == 1 else jnp.concatenate(att_cols, axis=-1)
            att_ref[...] = att
        else:
            # next layer input = flatten over heads -> (N, H*D_out), one
            # lane-dense value instead of H narrow stores.
            h = outs[0] if num_heads == 1 else jnp.concatenate(outs, axis=-1)


# ----------------------------------------------------------------------------
# Wrapper: one pallas_call for the whole forward pass
# ----------------------------------------------------------------------------
def gat_forward(params, adj, src, dst, x, *, negative_slope=0.2):
    n = x.shape[0]
    e_cnt = int(src.shape[0])

    eid = jnp.arange(e_cnt)
    src_oh = jnp.zeros((e_cnt, n), jnp.float32).at[eid, src].set(1.0)
    dst_oh = jnp.zeros((e_cnt, n), jnp.float32).at[eid, dst].set(1.0)

    n_total = len(params)
    layer_cfgs = []
    inputs = [x.astype(jnp.float32), adj.astype(jnp.float32), src_oh, dst_oh]
    for i, p in enumerate(params):
        is_last = (i == n_total - 1)
        layer_cfgs.append((p['num_heads'], p['out_feats'], not is_last, is_last))
        inputs += [p['w_bf16'], p['w_el'], p['w_er']]

    h_last = params[-1]['num_heads']
    num_classes = params[-1]['out_feats']

    # Advisory cost estimate for the XLA scheduler.
    flops = 0
    transc = 0
    for p in params:
        hh, dd = p['num_heads'], p['out_feats']
        din = p['w_bf16'].shape[0]
        flops += 2 * n * din * hh * dd          # fc
        flops += 4 * n * din * hh               # el / er
        flops += 2 * hh * n * n * dd            # a^T @ z
        flops += 8 * hh * n * n                 # softmax elementwise
        transc += hh * n * n                    # exp
    out_bytes = n * num_classes * 4 + e_cnt * h_last * 4 + n * 4
    in_bytes = sum(int(a.size) * a.dtype.itemsize for a in inputs)
    ce = pl.CostEstimate(flops=flops, transcendentals=transc,
                         bytes_accessed=in_bytes + out_bytes)

    kernel = functools.partial(_gat_fused_kernel,
                               layer_cfgs=tuple(layer_cfgs),
                               negative_slope=negative_slope)
    vmem = pl.BlockSpec(memory_space=pltpu.MemorySpace.VMEM)

    logits, att, f = pl.pallas_call(
        kernel,
        out_shape=(
            jax.ShapeDtypeStruct((n, num_classes), jnp.float32),
            jax.ShapeDtypeStruct((e_cnt, h_last), jnp.float32),
            jax.ShapeDtypeStruct((n, 1), jnp.float32),
        ),
        in_specs=[vmem] * len(inputs),
        out_specs=(vmem, vmem, vmem),
        compiler_params=pltpu.CompilerParams(vmem_limit_bytes=32 * 1024 * 1024),
        cost_estimate=ce,
    )(*inputs)

    # DGL edata['a'].squeeze(): (E, H, 1) -> (E,) when the last layer has 1 head.
    att = att[:, 0] if h_last == 1 else att
    return logits, att, f[:, 0]


# ----------------------------------------------------------------------------
# Parameter construction (deterministic, xavier-normal-like with relu gain)
# ----------------------------------------------------------------------------
def xavier_normal(key, fan_out, fan_in, shape, gain):
    std = gain * math.sqrt(2.0 / (fan_in + fan_out))
    return std * jax.random.normal(key, shape, dtype=jnp.float32)


def init_gat_params(key, num_layers, in_dim, num_hidden, num_classes, heads):
    gain = math.sqrt(2.0)  # calculate_gain('relu')
    dims = [(in_dim, num_hidden, heads[0])]
    for l in range(1, num_layers):
        dims.append((num_hidden * heads[l - 1], num_hidden, heads[l]))
    dims.append((num_hidden * heads[-2], num_classes, heads[-1]))

    params = []
    for (d_in, d_out, h) in dims:
        key, k1, k2, k3 = jax.random.split(key, 4)
        # fc.weight: (h*d_out, d_in) in torch; stored transposed for the kernel.
        w = xavier_normal(k1, h * d_out, d_in, (h * d_out, d_in), gain)
        attn_l = xavier_normal(k2, h, d_out, (h, d_out), gain)
        attn_r = xavier_normal(k3, h, d_out, (h, d_out), gain)
        w_t = jnp.asarray(w.T)                                 # (d_in, h*d_out)
        w3 = w_t.reshape(d_in, h, d_out)
        w_el = jnp.sum(w3 * attn_l[None, :, :], axis=-1)       # (d_in, h)
        w_er = jnp.sum(w3 * attn_r[None, :, :], axis=-1)       # (d_in, h)
        params.append(dict(
            w_t=w_t, attn_l=attn_l, attn_r=attn_r,
            w_bf16=w_t.astype(jnp.bfloat16),
            w_el=w_el.astype(jnp.float32),
            w_er=w_er.astype(jnp.float32),
            num_heads=h, out_feats=d_out))
    return params


# ----------------------------------------------------------------------------
# Pure-JAX reference (for correctness check only)
# ----------------------------------------------------------------------------
def gat_forward_ref(params, adj, src, dst, x, negative_slope=0.2):
    mask = adj > 0.0
    h = x
    n_total = len(params)
    logits = att_last = f = None
    for i, p in enumerate(params):
        is_last = (i == n_total - 1)
        if is_last:
            f = jnp.sqrt(jnp.sum(h * h, axis=1))
        H, D = p['num_heads'], p['out_feats']
        z = (h @ p['w_t']).reshape(-1, H, D)                    # (N, H, D)
        el = jnp.sum(z * p['attn_l'][None], axis=-1)            # (N, H)
        er = jnp.sum(z * p['attn_r'][None], axis=-1)            # (N, H)
        e = el[:, None, :] + er[None, :, :]                     # (Nsrc, Ndst, H)
        e = jnp.where(e >= 0.0, e, negative_slope * e)
        e = jnp.where(mask[:, :, None], e, NEG_INF)
        m = jnp.max(e, axis=0, keepdims=True)
        pexp = jnp.exp(e - m) * mask[:, :, None]
        s = jnp.sum(pexp, axis=0, keepdims=True)
        a = pexp / jnp.maximum(s, 1e-30)
        rst = jnp.einsum('uvh,uhd->vhd', a, z)
        if not is_last:
            rst = jnp.where(rst > 0.0, rst, jnp.exp(rst) - 1.0)
            h = rst.reshape(rst.shape[0], -1)
        else:
            logits = rst.mean(axis=1)
            att_last = a[src, dst, :]
            if H == 1:
                att_last = att_last[:, 0]
    return logits, att_last, f


# ----------------------------------------------------------------------------
# Demo
# ----------------------------------------------------------------------------
if __name__ == "__main__":
    # small config
    N = 8            # nodes
    in_dim = 16
    num_hidden = 8
    num_classes = 4
    num_layers = 2
    heads = (2, 2, 1)  # len = num_layers + 1

    # deterministic graph: ring (both directions) + self loops (no 0-in-degree)
    src_list, dst_list = [], []
    for u in range(N):
        for v in (u, (u + 1) % N, (u - 1) % N):
            src_list.append(u)
            dst_list.append(v)
    src = jnp.asarray(np.asarray(src_list, dtype=np.int32))
    dst = jnp.asarray(np.asarray(dst_list, dtype=np.int32))
    adj = jnp.zeros((N, N), jnp.float32).at[src, dst].set(1.0)

    key = jax.random.PRNGKey(0)
    key, kx, kp = jax.random.split(key, 3)
    x = jax.random.normal(kx, (N, in_dim), dtype=jnp.float32)
    params = init_gat_params(kp, num_layers, in_dim, num_hidden,
                             num_classes, heads)

    logits, att, f = gat_forward(params, adj, src, dst, x)
    jax.block_until_ready((logits, att, f))

    assert logits.shape == (N, num_classes)
    assert att.shape == (src.shape[0],)       # last layer has 1 head -> squeezed
    assert f.shape == (N,)
    assert bool(jnp.all(jnp.isfinite(logits)))
    assert bool(jnp.all(jnp.isfinite(att)))
    assert bool(jnp.all(jnp.isfinite(f)))

    # correctness vs. pure-JAX f32 reference (loose tolerance: bf16 MXU operands
    # + approx reciprocal in the kernel)
    logits_r, att_r, f_r = gat_forward_ref(params, adj, src, dst, x)
    np.testing.assert_allclose(np.asarray(logits), np.asarray(logits_r),
                               rtol=0.1, atol=0.05)
    np.testing.assert_allclose(np.asarray(att), np.asarray(att_r),
                               rtol=0.1, atol=0.05)
    np.testing.assert_allclose(np.asarray(f), np.asarray(f_r),
                               rtol=0.1, atol=0.05)

    # TODO(synk): feat_drop/attn_drop are 0.0 and residual=False in this config,
    # so dropout/residual branches are identity and not emitted.
    print("KERNEL_OK")
</pallas_src>

<mosaic_0001>
module attributes {stable_mosaic.version = 11 : i64} {
  func.func @_gat_fused_kernel(%arg0: memref<8x16xf32, #tpu.memory_space<vmem>>, %arg1: memref<8x8xf32, #tpu.memory_space<vmem>>, %arg2: memref<24x8xf32, #tpu.memory_space<vmem>>, %arg3: memref<24x8xf32, #tpu.memory_space<vmem>>, %arg4: memref<16x16xbf16, #tpu.memory_space<vmem>>, %arg5: memref<16x2xf32, #tpu.memory_space<vmem>>, %arg6: memref<16x2xf32, #tpu.memory_space<vmem>>, %arg7: memref<16x16xbf16, #tpu.memory_space<vmem>>, %arg8: memref<16x2xf32, #tpu.memory_space<vmem>>, %arg9: memref<16x2xf32, #tpu.memory_space<vmem>>, %arg10: memref<16x4xbf16, #tpu.memory_space<vmem>>, %arg11: memref<16x1xf32, #tpu.memory_space<vmem>>, %arg12: memref<16x1xf32, #tpu.memory_space<vmem>>, %arg13: memref<8x4xf32, #tpu.memory_space<vmem>>, %arg14: memref<24x1xf32, #tpu.memory_space<vmem>>, %arg15: memref<8x1xf32, #tpu.memory_space<vmem>>) attributes {dimension_semantics = [], scalar_prefetch = 0 : i64, scratch_operands = 0 : i64, tpu.core_type = #tpu.core_type<tc>} {
    %c0 = arith.constant 0 : index
    %c0_0 = arith.constant 0 : index
    %0 = vector.load %arg1[%c0, %c0_0] : memref<8x8xf32, #tpu.memory_space<vmem>>, vector<8x8xf32>
    %cst = arith.constant 0.000000e+00 : f32
    %1 = vector.broadcast %cst : f32 to vector<8x8xf32>
    %2 = arith.cmpf ogt, %0, %1 : vector<8x8xf32>
    %c0_1 = arith.constant 0 : index
    %c0_2 = arith.constant 0 : index
    %3 = vector.load %arg2[%c0_1, %c0_2] : memref<24x8xf32, #tpu.memory_space<vmem>>, vector<24x8xf32>
    %c0_3 = arith.constant 0 : index
    %c0_4 = arith.constant 0 : index
    %4 = vector.load %arg3[%c0_3, %c0_4] : memref<24x8xf32, #tpu.memory_space<vmem>>, vector<24x8xf32>
    %c0_5 = arith.constant 0 : index
    %c0_6 = arith.constant 0 : index
    %5 = vector.load %arg0[%c0_5, %c0_6] : memref<8x16xf32, #tpu.memory_space<vmem>>, vector<8x16xf32>
    %6 = arith.truncf %5 : vector<8x16xf32> to vector<8x16xbf16>
    %c0_7 = arith.constant 0 : index
    %c0_8 = arith.constant 0 : index
    %7 = vector.load %arg4[%c0_7, %c0_8] : memref<16x16xbf16, #tpu.memory_space<vmem>>, vector<16x16xbf16>
    %cst_9 = arith.constant dense<0.000000e+00> : vector<8x16xf32>
    %8 = tpu.matmul %6, %7, %cst_9 {dimension_numbers = #tpu.dot_dimension_numbers<[1], [0], [0], [1], [0, 0, 1, 1], [], []>} : vector<8x16xbf16>, vector<16x16xbf16>, vector<8x16xf32> -> vector<8x16xf32>
    %c0_10 = arith.constant 0 : index
    %c0_11 = arith.constant 0 : index
    %9 = vector.load %arg5[%c0_10, %c0_11] : memref<16x2xf32, #tpu.memory_space<vmem>>, vector<16x2xf32>
    %cst_12 = arith.constant dense<0.000000e+00> : vector<8x2xf32>
    %10 = tpu.matmul %5, %9, %cst_12 {dimension_numbers = #tpu.dot_dimension_numbers<[1], [0], [0], [1], [0, 0, 1, 1], [], []>} : vector<8x16xf32>, vector<16x2xf32>, vector<8x2xf32> -> vector<8x2xf32>
    %c0_13 = arith.constant 0 : index
    %c0_14 = arith.constant 0 : index
    %11 = vector.load %arg6[%c0_13, %c0_14] : memref<16x2xf32, #tpu.memory_space<vmem>>, vector<16x2xf32>
    %cst_15 = arith.constant dense<0.000000e+00> : vector<2x8xf32>
    %12 = tpu.matmul %11, %5, %cst_15 {dimension_numbers = #tpu.dot_dimension_numbers<[0], [1], [1], [0], [0, 1, 1, 0], [], []>} : vector<16x2xf32>, vector<8x16xf32>, vector<2x8xf32> -> vector<2x8xf32>
    %13 = vector.extract_strided_slice %8 {offsets = [0, 0], sizes = [8, 8], strides = [1, 1]} : vector<8x16xf32> to vector<8x8xf32>
    %14 = vector.extract_strided_slice %10 {offsets = [0, 0], sizes = [8, 1], strides = [1, 1]} : vector<8x2xf32> to vector<8x1xf32>
    %15 = vector.extract_strided_slice %12 {offsets = [0, 0], sizes = [1, 8], strides = [1, 1]} : vector<2x8xf32> to vector<1x8xf32>
    %16 = vector.broadcast %14 : vector<8x1xf32> to vector<8x8xf32>
    %17 = vector.broadcast %15 : vector<1x8xf32> to vector<8x8xf32>
    %18 = arith.addf %16, %17 : vector<8x8xf32>
    %cst_16 = arith.constant 0.000000e+00 : f32
    %19 = vector.broadcast %cst_16 : f32 to vector<8x8xf32>
    %20 = arith.cmpf oge, %18, %19 : vector<8x8xf32>
    %cst_17 = arith.constant 2.000000e-01 : f32
    %21 = vector.broadcast %cst_17 : f32 to vector<8x8xf32>
    %22 = arith.mulf %21, %18 : vector<8x8xf32>
    %23 = arith.select %20, %18, %22 : vector<8x8xi1>, vector<8x8xf32>
    %cst_18 = arith.constant -1.000000e+30 : f32
    %24 = vector.broadcast %cst_18 : f32 to vector<8x8xf32>
    %25 = arith.select %2, %23, %24 : vector<8x8xi1>, vector<8x8xf32>
    %cst_19 = arith.constant dense<0xFF800000> : vector<8xf32>
    %26 = vector.multi_reduction <maximumf>, %25, %cst_19 [0] : vector<8x8xf32> to vector<8xf32>
    %27 = vector.shape_cast %26 : vector<8xf32> to vector<1x8xf32>
    %28 = vector.broadcast %27 : vector<1x8xf32> to vector<8x8xf32>
    %29 = arith.subf %25, %28 : vector<8x8xf32>
    %30 = math.exp %29 : vector<8x8xf32>
    %cst_20 = arith.constant dense<0.000000e+00> : vector<8xf32>
    %31 = vector.multi_reduction <add>, %30, %cst_20 [0] : vector<8x8xf32> to vector<8xf32>
    %32 = vector.shape_cast %31 : vector<8xf32> to vector<1x8xf32>
    %cst_21 = arith.constant 1.000000e-30 : f32
    %33 = vector.broadcast %cst_21 : f32 to vector<1x8xf32>
    %34 = arith.maximumf %32, %33 : vector<1x8xf32>
    %35 = tpu.reciprocal %34 {approx = true} : vector<1x8xf32> -> vector<1x8xf32>
    %36 = vector.broadcast %35 : vector<1x8xf32> to vector<8x8xf32>
    %37 = arith.mulf %30, %36 : vector<8x8xf32>
    %38 = arith.truncf %37 : vector<8x8xf32> to vector<8x8xbf16>
    %39 = arith.truncf %13 : vector<8x8xf32> to vector<8x8xbf16>
    %cst_22 = arith.constant dense<0.000000e+00> : vector<8x8xf32>
    %40 = tpu.matmul %38, %39, %cst_22 {dimension_numbers = #tpu.dot_dimension_numbers<[0], [0], [1], [1], [0, 1, 1, 1], [], []>} : vector<8x8xbf16>, vector<8x8xbf16>, vector<8x8xf32> -> vector<8x8xf32>
    %cst_23 = arith.constant 0.000000e+00 : f32
    %41 = vector.broadcast %cst_23 : f32 to vector<8x8xf32>
    %42 = arith.cmpf ogt, %40, %41 : vector<8x8xf32>
    %43 = math.exp %40 : vector<8x8xf32>
    %cst_24 = arith.constant 1.000000e+00 : f32
    %44 = vector.broadcast %cst_24 : f32 to vector<8x8xf32>
    %45 = arith.subf %43, %44 : vector<8x8xf32>
    %46 = arith.select %42, %40, %45 : vector<8x8xi1>, vector<8x8xf32>
    %47 = vector.extract_strided_slice %8 {offsets = [0, 8], sizes = [8, 8], strides = [1, 1]} : vector<8x16xf32> to vector<8x8xf32>
    %48 = vector.extract_strided_slice %10 {offsets = [0, 1], sizes = [8, 1], strides = [1, 1]} : vector<8x2xf32> to vector<8x1xf32>
    %49 = vector.extract_strided_slice %12 {offsets = [1, 0], sizes = [1, 8], strides = [1, 1]} : vector<2x8xf32> to vector<1x8xf32>
    %50 = vector.broadcast %48 : vector<8x1xf32> to vector<8x8xf32>
    %51 = vector.broadcast %49 : vector<1x8xf32> to vector<8x8xf32>
    %52 = arith.addf %50, %51 : vector<8x8xf32>
    %cst_25 = arith.constant 0.000000e+00 : f32
    %53 = vector.broadcast %cst_25 : f32 to vector<8x8xf32>
    %54 = arith.cmpf oge, %52, %53 : vector<8x8xf32>
    %cst_26 = arith.constant 2.000000e-01 : f32
    %55 = vector.broadcast %cst_26 : f32 to vector<8x8xf32>
    %56 = arith.mulf %55, %52 : vector<8x8xf32>
    %57 = arith.select %54, %52, %56 : vector<8x8xi1>, vector<8x8xf32>
    %cst_27 = arith.constant -1.000000e+30 : f32
    %58 = vector.broadcast %cst_27 : f32 to vector<8x8xf32>
    %59 = arith.select %2, %57, %58 : vector<8x8xi1>, vector<8x8xf32>
    %cst_28 = arith.constant dense<0xFF800000> : vector<8xf32>
    %60 = vector.multi_reduction <maximumf>, %59, %cst_28 [0] : vector<8x8xf32> to vector<8xf32>
    %61 = vector.shape_cast %60 : vector<8xf32> to vector<1x8xf32>
    %62 = vector.broadcast %61 : vector<1x8xf32> to vector<8x8xf32>
    %63 = arith.subf %59, %62 : vector<8x8xf32>
    %64 = math.exp %63 : vector<8x8xf32>
    %cst_29 = arith.constant dense<0.000000e+00> : vector<8xf32>
    %65 = vector.multi_reduction <add>, %64, %cst_29 [0] : vector<8x8xf32> to vector<8xf32>
    %66 = vector.shape_cast %65 : vector<8xf32> to vector<1x8xf32>
    %cst_30 = arith.constant 1.000000e-30 : f32
    %67 = vector.broadcast %cst_30 : f32 to vector<1x8xf32>
    %68 = arith.maximumf %66, %67 : vector<1x8xf32>
    %69 = tpu.reciprocal %68 {approx = true} : vector<1x8xf32> -> vector<1x8xf32>
    %70 = vector.broadcast %69 : vector<1x8xf32> to vector<8x8xf32>
    %71 = arith.mulf %64, %70 : vector<8x8xf32>
    %72 = arith.truncf %71 : vector<8x8xf32> to vector<8x8xbf16>
    %73 = arith.truncf %47 : vector<8x8xf32> to vector<8x8xbf16>
    %cst_31 = arith.constant dense<0.000000e+00> : vector<8x8xf32>
    %74 = tpu.matmul %72, %73, %cst_31 {dimension_numbers = #tpu.dot_dimension_numbers<[0], [0], [1], [1], [0, 1, 1, 1], [], []>} : vector<8x8xbf16>, vector<8x8xbf16>, vector<8x8xf32> -> vector<8x8xf32>
    %cst_32 = arith.constant 0.000000e+00 : f32
    %75 = vector.broadcast %cst_32 : f32 to vector<8x8xf32>
    %76 = arith.cmpf ogt, %74, %75 : vector<8x8xf32>
    %77 = math.exp %74 : vector<8x8xf32>
    %cst_33 = arith.constant 1.000000e+00 : f32
    %78 = vector.broadcast %cst_33 : f32 to vector<8x8xf32>
    %79 = arith.subf %77, %78 : vector<8x8xf32>
    %80 = arith.select %76, %74, %79 : vector<8x8xi1>, vector<8x8xf32>
    %81 = tpu.concatenate %46, %80 in 1 : vector<8x8xf32>, vector<8x8xf32> -> vector<8x16xf32>
    %82 = arith.truncf %81 : vector<8x16xf32> to vector<8x16xbf16>
    %c0_34 = arith.constant 0 : index
    %c0_35 = arith.constant 0 : index
    %83 = vector.load %arg7[%c0_34, %c0_35] : memref<16x16xbf16, #tpu.memory_space<vmem>>, vector<16x16xbf16>
    %cst_36 = arith.constant dense<0.000000e+00> : vector<8x16xf32>
    %84 = tpu.matmul %82, %83, %cst_36 {dimension_numbers = #tpu.dot_dimension_numbers<[1], [0], [0], [1], [0, 0, 1, 1], [], []>} : vector<8x16xbf16>, vector<16x16xbf16>, vector<8x16xf32> -> vector<8x16xf32>
    %c0_37 = arith.constant 0 : index
    %c0_38 = arith.constant 0 : index
    %85 = vector.load %arg8[%c0_37, %c0_38] : memref<16x2xf32, #tpu.memory_space<vmem>>, vector<16x2xf32>
    %cst_39 = arith.constant dense<0.000000e+00> : vector<8x2xf32>
    %86 = tpu.matmul %81, %85, %cst_39 {dimension_numbers = #tpu.dot_dimension_numbers<[1], [0], [0], [1], [0, 0, 1, 1], [], []>} : vector<8x16xf32>, vector<16x2xf32>, vector<8x2xf32> -> vector<8x2xf32>
    %c0_40 = arith.constant 0 : index
    %c0_41 = arith.constant 0 : index
    %87 = vector.load %arg9[%c0_40, %c0_41] : memref<16x2xf32, #tpu.memory_space<vmem>>, vector<16x2xf32>
    %cst_42 = arith.constant dense<0.000000e+00> : vector<2x8xf32>
    %88 = tpu.matmul %87, %81, %cst_42 {dimension_numbers = #tpu.dot_dimension_numbers<[0], [1], [1], [0], [0, 1, 1, 0], [], []>} : vector<16x2xf32>, vector<8x16xf32>, vector<2x8xf32> -> vector<2x8xf32>
    %89 = vector.extract_strided_slice %84 {offsets = [0, 0], sizes = [8, 8], strides = [1, 1]} : vector<8x16xf32> to vector<8x8xf32>
    %90 = vector.extract_strided_slice %86 {offsets = [0, 0], sizes = [8, 1], strides = [1, 1]} : vector<8x2xf32> to vector<8x1xf32>
    %91 = vector.extract_strided_slice %88 {offsets = [0, 0], sizes = [1, 8], strides = [1, 1]} : vector<2x8xf32> to vector<1x8xf32>
    %92 = vector.broadcast %90 : vector<8x1xf32> to vector<8x8xf32>
    %93 = vector.broadcast %91 : vector<1x8xf32> to vector<8x8xf32>
    %94 = arith.addf %92, %93 : vector<8x8xf32>
    %cst_43 = arith.constant 0.000000e+00 : f32
    %95 = vector.broadcast %cst_43 : f32 to vector<8x8xf32>
    %96 = arith.cmpf oge, %94, %95 : vector<8x8xf32>
    %cst_44 = arith.constant 2.000000e-01 : f32
    %97 = vector.broadcast %cst_44 : f32 to vector<8x8xf32>
    %98 = arith.mulf %97, %94 : vector<8x8xf32>
    %99 = arith.select %96, %94, %98 : vector<8x8xi1>, vector<8x8xf32>
    %cst_45 = arith.constant -1.000000e+30 : f32
    %100 = vector.broadcast %cst_45 : f32 to vector<8x8xf32>
    %101 = arith.select %2, %99, %100 : vector<8x8xi1>, vector<8x8xf32>
    %cst_46 = arith.constant dense<0xFF800000> : vector<8xf32>
    %102 = vector.multi_reduction <maximumf>, %101, %cst_46 [0] : vector<8x8xf32> to vector<8xf32>
    %103 = vector.shape_cast %102 : vector<8xf32> to vector<1x8xf32>
    %104 = vector.broadcast %103 : vector<1x8xf32> to vector<8x8xf32>
    %105 = arith.subf %101, %104 : vector<8x8xf32>
    %106 = math.exp %105 : vector<8x8xf32>
    %cst_47 = arith.constant dense<0.000000e+00> : vector<8xf32>
    %107 = vector.multi_reduction <add>, %106, %cst_47 [0] : vector<8x8xf32> to vector<8xf32>
    %108 = vector.shape_cast %107 : vector<8xf32> to vector<1x8xf32>
    %cst_48 = arith.constant 1.000000e-30 : f32
    %109 = vector.broadcast %cst_48 : f32 to vector<1x8xf32>
    %110 = arith.maximumf %108, %109 : vector<1x8xf32>
    %111 = tpu.reciprocal %110 {approx = true} : vector<1x8xf32> -> vector<1x8xf32>
    %112 = vector.broadcast %111 : vector<1x8xf32> to vector<8x8xf32>
    %113 = arith.mulf %106, %112 : vector<8x8xf32>
    %114 = arith.truncf %113 : vector<8x8xf32> to vector<8x8xbf16>
    %115 = arith.truncf %89 : vector<8x8xf32> to vector<8x8xbf16>
    %cst_49 = arith.constant dense<0.000000e+00> : vector<8x8xf32>
    %116 = tpu.matmul %114, %115, %cst_49 {dimension_numbers = #tpu.dot_dimension_numbers<[0], [0], [1], [1], [0, 1, 1, 1], [], []>} : vector<8x8xbf16>, vector<8x8xbf16>, vector<8x8xf32> -> vector<8x8xf32>
    %cst_50 = arith.constant 0.000000e+00 : f32
    %117 = vector.broadcast %cst_50 : f32 to vector<8x8xf32>
    %118 = arith.cmpf ogt, %116, %117 : vector<8x8xf32>
    %119 = math.exp %116 : vector<8x8xf32>
    %cst_51 = arith.constant 1.000000e+00 : f32
    %120 = vector.broadcast %cst_51 : f32 to vector<8x8xf32>
    %121 = arith.subf %119, %120 : vector<8x8xf32>
    %122 = arith.select %118, %116, %121 : vector<8x8xi1>, vector<8x8xf32>
    %123 = vector.extract_strided_slice %84 {offsets = [0, 8], sizes = [8, 8], strides = [1, 1]} : vector<8x16xf32> to vector<8x8xf32>
    %124 = vector.extract_strided_slice %86 {offsets = [0, 1], sizes = [8, 1], strides = [1, 1]} : vector<8x2xf32> to vector<8x1xf32>
    %125 = vector.extract_strided_slice %88 {offsets = [1, 0], sizes = [1, 8], strides = [1, 1]} : vector<2x8xf32> to vector<1x8xf32>
    %126 = vector.broadcast %124 : vector<8x1xf32> to vector<8x8xf32>
    %127 = vector.broadcast %125 : vector<1x8xf32> to vector<8x8xf32>
    %128 = arith.addf %126, %127 : vector<8x8xf32>
    %cst_52 = arith.constant 0.000000e+00 : f32
    %129 = vector.broadcast %cst_52 : f32 to vector<8x8xf32>
    %130 = arith.cmpf oge, %128, %129 : vector<8x8xf32>
    %cst_53 = arith.constant 2.000000e-01 : f32
    %131 = vector.broadcast %cst_53 : f32 to vector<8x8xf32>
    %132 = arith.mulf %131, %128 : vector<8x8xf32>
    %133 = arith.select %130, %128, %132 : vector<8x8xi1>, vector<8x8xf32>
    %cst_54 = arith.constant -1.000000e+30 : f32
    %134 = vector.broadcast %cst_54 : f32 to vector<8x8xf32>
    %135 = arith.select %2, %133, %134 : vector<8x8xi1>, vector<8x8xf32>
    %cst_55 = arith.constant dense<0xFF800000> : vector<8xf32>
    %136 = vector.multi_reduction <maximumf>, %135, %cst_55 [0] : vector<8x8xf32> to vector<8xf32>
    %137 = vector.shape_cast %136 : vector<8xf32> to vector<1x8xf32>
    %138 = vector.broadcast %137 : vector<1x8xf32> to vector<8x8xf32>
    %139 = arith.subf %135, %138 : vector<8x8xf32>
    %140 = math.exp %139 : vector<8x8xf32>
    %cst_56 = arith.constant dense<0.000000e+00> : vector<8xf32>
    %141 = vector.multi_reduction <add>, %140, %cst_56 [0] : vector<8x8xf32> to vector<8xf32>
    %142 = vector.shape_cast %141 : vector<8xf32> to vector<1x8xf32>
    %cst_57 = arith.constant 1.000000e-30 : f32
    %143 = vector.broadcast %cst_57 : f32 to vector<1x8xf32>
    %144 = arith.maximumf %142, %143 : vector<1x8xf32>
    %145 = tpu.reciprocal %144 {approx = true} : vector<1x8xf32> -> vector<1x8xf32>
    %146 = vector.broadcast %145 : vector<1x8xf32> to vector<8x8xf32>
    %147 = arith.mulf %140, %146 : vector<8x8xf32>
    %148 = arith.truncf %147 : vector<8x8xf32> to vector<8x8xbf16>
    %149 = arith.truncf %123 : vector<8x8xf32> to vector<8x8xbf16>
    %cst_58 = arith.constant dense<0.000000e+00> : vector<8x8xf32>
    %150 = tpu.matmul %148, %149, %cst_58 {dimension_numbers = #tpu.dot_dimension_numbers<[0], [0], [1], [1], [0, 1, 1, 1], [], []>} : vector<8x8xbf16>, vector<8x8xbf16>, vector<8x8xf32> -> vector<8x8xf32>
    %cst_59 = arith.constant 0.000000e+00 : f32
    %151 = vector.broadcast %cst_59 : f32 to vector<8x8xf32>
    %152 = arith.cmpf ogt, %150, %151 : vector<8x8xf32>
    %153 = math.exp %150 : vector<8x8xf32>
    %cst_60 = arith.constant 1.000000e+00 : f32
    %154 = vector.broadcast %cst_60 : f32 to vector<8x8xf32>
    %155 = arith.subf %153, %154 : vector<8x8xf32>
    %156 = arith.select %152, %150, %155 : vector<8x8xi1>, vector<8x8xf32>
    %157 = tpu.concatenate %122, %156 in 1 : vector<8x8xf32>, vector<8x8xf32> -> vector<8x16xf32>
    %158 = arith.mulf %157, %157 : vector<8x16xf32>
    %cst_61 = arith.constant dense<0.000000e+00> : vector<8xf32>
    %159 = vector.multi_reduction <add>, %158, %cst_61 [1] : vector<8x16xf32> to vector<8xf32>
    %160 = vector.shape_cast %159 : vector<8xf32> to vector<8x1xf32>
    %161 = math.sqrt %160 : vector<8x1xf32>
    %c0_62 = arith.constant 0 : index
    %c0_63 = arith.constant 0 : index
    %162 = vector.load %arg15[%c0_62, %c0_63] : memref<8x1xf32, #tpu.memory_space<vmem>>, vector<8x1xf32>
    tpu.vector_store %arg15[%c0_62, %c0_63], %161 {strides = array<i32>} : memref<8x1xf32, #tpu.memory_space<vmem>>, vector<8x1xf32>,
    %163 = arith.truncf %157 : vector<8x16xf32> to vector<8x16xbf16>
    %c0_64 = arith.constant 0 : index
    %c0_65 = arith.constant 0 : index
    %164 = vector.load %arg10[%c0_64, %c0_65] : memref<16x4xbf16, #tpu.memory_space<vmem>>, vector<16x4xbf16>
    %cst_66 = arith.constant dense<0.000000e+00> : vector<8x4xf32>
    %165 = tpu.matmul %163, %164, %cst_66 {dimension_numbers = #tpu.dot_dimension_numbers<[1], [0], [0], [1], [0, 0, 1, 1], [], []>} : vector<8x16xbf16>, vector<16x4xbf16>, vector<8x4xf32> -> vector<8x4xf32>
    %c0_67 = arith.constant 0 : index
    %c0_68 = arith.constant 0 : index
    %166 = vector.load %arg11[%c0_67, %c0_68] : memref<16x1xf32, #tpu.memory_space<vmem>>, vector<16x1xf32>
    %cst_69 = arith.constant dense<0.000000e+00> : vector<8x1xf32>
    %167 = tpu.matmul %157, %166, %cst_69 {dimension_numbers = #tpu.dot_dimension_numbers<[1], [0], [0], [1], [0, 0, 1, 1], [], []>} : vector<8x16xf32>, vector<16x1xf32>, vector<8x1xf32> -> vector<8x1xf32>
    %c0_70 = arith.constant 0 : index
    %c0_71 = arith.constant 0 : index
    %168 = vector.load %arg12[%c0_70, %c0_71] : memref<16x1xf32, #tpu.memory_space<vmem>>, vector<16x1xf32>
    %cst_72 = arith.constant dense<0.000000e+00> : vector<1x8xf32>
    %169 = tpu.matmul %168, %157, %cst_72 {dimension_numbers = #tpu.dot_dimension_numbers<[0], [1], [1], [0], [0, 1, 1, 0], [], []>} : vector<16x1xf32>, vector<8x16xf32>, vector<1x8xf32> -> vector<1x8xf32>
    %170 = vector.broadcast %167 : vector<8x1xf32> to vector<8x8xf32>
    %171 = vector.broadcast %169 : vector<1x8xf32> to vector<8x8xf32>
    %172 = arith.addf %170, %171 : vector<8x8xf32>
    %cst_73 = arith.constant 0.000000e+00 : f32
    %173 = vector.broadcast %cst_73 : f32 to vector<8x8xf32>
    %174 = arith.cmpf oge, %172, %173 : vector<8x8xf32>
    %cst_74 = arith.constant 2.000000e-01 : f32
    %175 = vector.broadcast %cst_74 : f32 to vector<8x8xf32>
    %176 = arith.mulf %175, %172 : vector<8x8xf32>
    %177 = arith.select %174, %172, %176 : vector<8x8xi1>, vector<8x8xf32>
    %cst_75 = arith.constant -1.000000e+30 : f32
    %178 = vector.broadcast %cst_75 : f32 to vector<8x8xf32>
    %179 = arith.select %2, %177, %178 : vector<8x8xi1>, vector<8x8xf32>
    %cst_76 = arith.constant dense<0xFF800000> : vector<8xf32>
    %180 = vector.multi_reduction <maximumf>, %179, %cst_76 [0] : vector<8x8xf32> to vector<8xf32>
    %181 = vector.shape_cast %180 : vector<8xf32> to vector<1x8xf32>
    %182 = vector.broadcast %181 : vector<1x8xf32> to vector<8x8xf32>
    %183 = arith.subf %179, %182 : vector<8x8xf32>
    %184 = math.exp %183 : vector<8x8xf32>
    %cst_77 = arith.constant dense<0.000000e+00> : vector<8xf32>
    %185 = vector.multi_reduction <add>, %184, %cst_77 [0] : vector<8x8xf32> to vector<8xf32>
    %186 = vector.shape_cast %185 : vector<8xf32> to vector<1x8xf32>
    %cst_78 = arith.constant 1.000000e-30 : f32
    %187 = vector.broadcast %cst_78 : f32 to vector<1x8xf32>
    %188 = arith.maximumf %186, %187 : vector<1x8xf32>
    %189 = tpu.reciprocal %188 {approx = true} : vector<1x8xf32> -> vector<1x8xf32>
    %190 = vector.broadcast %189 : vector<1x8xf32> to vector<8x8xf32>
    %191 = arith.mulf %184, %190 : vector<8x8xf32>
    %192 = arith.truncf %191 : vector<8x8xf32> to vector<8x8xbf16>
    %193 = arith.truncf %165 : vector<8x4xf32> to vector<8x4xbf16>
    %cst_79 = arith.constant dense<0.000000e+00> : vector<8x4xf32>
    %194 = tpu.matmul %192, %193, %cst_79 {dimension_numbers = #tpu.dot_dimension_numbers<[0], [0], [1], [1], [0, 1, 1, 1], [], []>} : vector<8x8xbf16>, vector<8x4xbf16>, vector<8x4xf32> -> vector<8x4xf32>
    %cst_80 = arith.constant dense<0.000000e+00> : vector<24x8xf32>
    %195 = tpu.matmul %3, %191, %cst_80 {dimension_numbers = #tpu.dot_dimension_numbers<[1], [0], [0], [1], [0, 0, 1, 1], [], []>} : vector<24x8xf32>, vector<8x8xf32>, vector<24x8xf32> -> vector<24x8xf32>
    %196 = arith.mulf %195, %4 : vector<24x8xf32>
    %cst_81 = arith.constant dense<0.000000e+00> : vector<24xf32>
    %197 = vector.multi_reduction <add>, %196, %cst_81 [1] : vector<24x8xf32> to vector<24xf32>
    %198 = vector.shape_cast %197 : vector<24xf32> to vector<24x1xf32>
    %cst_82 = arith.constant 1.000000e+00 : f32
    %199 = vector.broadcast %cst_82 : f32 to vector<8x4xf32>
    %200 = arith.mulf %194, %199 : vector<8x4xf32>
    %c0_83 = arith.constant 0 : index
    %c0_84 = arith.constant 0 : index
    %201 = vector.load %arg13[%c0_83, %c0_84] : memref<8x4xf32, #tpu.memory_space<vmem>>, vector<8x4xf32>
    tpu.vector_store %arg13[%c0_83, %c0_84], %200 {strides = array<i32>} : memref<8x4xf32, #tpu.memory_space<vmem>>, vector<8x4xf32>,
    %c0_85 = arith.constant 0 : index
    %c0_86 = arith.constant 0 : index
    %202 = vector.load %arg14[%c0_85, %c0_86] : memref<24x1xf32, #tpu.memory_space<vmem>>, vector<24x1xf32>
    tpu.vector_store %arg14[%c0_85, %c0_86], %198 {strides = array<i32>} : memref<24x1xf32, #tpu.memory_space<vmem>>, vector<24x1xf32>,
    return
  }
}

</mosaic_0001>

<llo_original>
// kernel: tpu_custom_call.1
$region0: #{tpu_custom_call.1}
  #allocation0 [shape = 'u32[]', space=smem, size = 0x4, offset = 0x4, fixed_abs, tag = 'smem constant byte address 0x4 - core index']
  #allocation1 [shape = 'u32[144,128]{1,0:T(1,128)}', space=vmem, size = 0x12000, scoped, tag = 'internal scratch']
  %s0 = inlined_call_operand.vmem [shape: f32[8,16], index: 0, kind: input, shape index: {}]
  %s1 = inlined_call_operand.vmem [shape: f32[8,8], index: 1, kind: input, shape index: {}]
  %s2 = inlined_call_operand.vmem [shape: f32[24,8], index: 2, kind: input, shape index: {}]
  %s3 = inlined_call_operand.vmem [shape: f32[24,8], index: 3, kind: input, shape index: {}]
  %s4 = inlined_call_operand.vmem [shape: bf16[16,16], index: 4, kind: input, shape index: {}]
  %s5 = inlined_call_operand.vmem [shape: f32[16,2], index: 5, kind: input, shape index: {}]
  %s6 = inlined_call_operand.vmem [shape: f32[16,2], index: 6, kind: input, shape index: {}]
  %s7 = inlined_call_operand.vmem [shape: bf16[16,16], index: 7, kind: input, shape index: {}]
  %s8 = inlined_call_operand.vmem [shape: f32[16,2], index: 8, kind: input, shape index: {}]
  %s9 = inlined_call_operand.vmem [shape: f32[16,2], index: 9, kind: input, shape index: {}]
  %s10 = inlined_call_operand.vmem [shape: bf16[16,4], index: 10, kind: input, shape index: {}]
  %s11 = inlined_call_operand.vmem [shape: f32[16,1], index: 11, kind: input, shape index: {}]
  %s12 = inlined_call_operand.vmem [shape: f32[16,1], index: 12, kind: input, shape index: {}]
  %s13 = inlined_call_operand.vmem [shape: f32[8,4], index: 13, kind: output, shape index: {0}]
  %s14 = inlined_call_operand.vmem [shape: f32[24,1], index: 14, kind: output, shape index: {1}]
  %s15 = inlined_call_operand.vmem [shape: f32[8,1], index: 15, kind: output, shape index: {2}]
  %16 = xla_tuple %s13, %s14, %s15
  %s17 = sld [smem:[#allocation0]]
  $region78: #{tpu_custom_call.1} parent=0
    _
  %s19 = ssub.s32 1, %s17
  %s20 = scalar_select 0, %s19, %s17
  // Predicated region
  $region2: #{tpu_custom_call.1} parent=0 // pred_check
    _
  $region3: #{tpu_custom_call.1} parent=0 // pred_check_branch
    %22 = sbr.rel (0) target = $region5
  $region4: #{tpu_custom_call.1} parent=0 // pred_region
    _
  $region5: #{tpu_custom_call.1} parent=0 // pred_fallthru
    _
  // Predicated region
  $region6: #{tpu_custom_call.1} parent=0 // pred_check
    _
  $region7: #{tpu_custom_call.1} parent=0 // pred_check_branch
    %24 = sbr.rel (0) target = $region9
  $region8: #{tpu_custom_call.1} parent=0 // pred_region
    _
  $region9: #{tpu_custom_call.1} parent=0 // pred_fallthru
    _
  // Predicated region
  $region10: #{tpu_custom_call.1} parent=0 // pred_check
    _
  $region11: #{tpu_custom_call.1} parent=0 // pred_check_branch
    %26 = sbr.rel (0) target = $region13
  $region12: #{tpu_custom_call.1} parent=0 // pred_region
    _
  $region13: #{tpu_custom_call.1} parent=0 // pred_fallthru
    _
  // Predicated region
  $region14: #{tpu_custom_call.1} parent=0 // pred_check
    _
  $region15: #{tpu_custom_call.1} parent=0 // pred_check_branch
    %28 = sbr.rel (0) target = $region17
  $region16: #{tpu_custom_call.1} parent=0 // pred_region
    _
  $region17: #{tpu_custom_call.1} parent=0 // pred_fallthru
    _
  // Predicated region
  $region18: #{tpu_custom_call.1} parent=0 // pred_check
    _
  $region19: #{tpu_custom_call.1} parent=0 // pred_check_branch
    %30 = sbr.rel (0) target = $region21
  $region20: #{tpu_custom_call.1} parent=0 // pred_region
    _
  $region21: #{tpu_custom_call.1} parent=0 // pred_fallthru
    _
  // Predicated region
  $region22: #{tpu_custom_call.1} parent=0 // pred_check
    _
  $region23: #{tpu_custom_call.1} parent=0 // pred_check_branch
    %32 = sbr.rel (0) target = $region25
  $region24: #{tpu_custom_call.1} parent=0 // pred_region
    _
  $region25: #{tpu_custom_call.1} parent=0 // pred_fallthru
    _
  // Predicated region
  $region26: #{tpu_custom_call.1} parent=0 // pred_check
    _
  $region27: #{tpu_custom_call.1} parent=0 // pred_check_branch
    %34 = sbr.rel (0) target = $region29
  $region28: #{tpu_custom_call.1} parent=0 // pred_region
    _
  $region29: #{tpu_custom_call.1} parent=0 // pred_fallthru
    _
  // Predicated region
  $region30: #{tpu_custom_call.1} parent=0 // pred_check
    _
  $region31: #{tpu_custom_call.1} parent=0 // pred_check_branch
    %36 = sbr.rel (0) target = $region33
  $region32: #{tpu_custom_call.1} parent=0 // pred_region
    _
  $region33: #{tpu_custom_call.1} parent=0 // pred_fallthru
    _
  // Predicated region
  $region34: #{tpu_custom_call.1} parent=0 // pred_check
    _
  $region35: #{tpu_custom_call.1} parent=0 // pred_check_branch
    %38 = sbr.rel (0) target = $region37
  $region36: #{tpu_custom_call.1} parent=0 // pred_region
    _
  $region37: #{tpu_custom_call.1} parent=0 // pred_fallthru
    _
  // Predicated region
  $region38: #{tpu_custom_call.1} parent=0 // pred_check
    _
  $region39: #{tpu_custom_call.1} parent=0 // pred_check_branch
    %40 = sbr.rel (0) target = $region41
  $region40: #{tpu_custom_call.1} parent=0 // pred_region
    _
  $region41: #{tpu_custom_call.1} parent=0 // pred_fallthru
    _
  // Predicated region
  $region42: #{tpu_custom_call.1} parent=0 // pred_check
    _
  $region43: #{tpu_custom_call.1} parent=0 // pred_check_branch
    %42 = sbr.rel (0) target = $region45
  $region44: #{tpu_custom_call.1} parent=0 // pred_region
    _
  $region45: #{tpu_custom_call.1} parent=0 // pred_fallthru
    _
  // Predicated region
  $region46: #{tpu_custom_call.1} parent=0 // pred_check
    _
  $region47: #{tpu_custom_call.1} parent=0 // pred_check_branch
    %44 = sbr.rel (0) target = $region49
  $region48: #{tpu_custom_call.1} parent=0 // pred_region
    _
  $region49: #{tpu_custom_call.1} parent=0 // pred_fallthru
    _
  // Predicated region
  $region50: #{tpu_custom_call.1} parent=0 // pred_check
    _
  $region51: #{tpu_custom_call.1} parent=0 // pred_check_branch
    %46 = sbr.rel (0) target = $region53
  $region52: #{tpu_custom_call.1} parent=0 // pred_region
    _
  $region53: #{tpu_custom_call.1} parent=0 // pred_fallthru
    _
  %v48 = vld [vmem:[%s1] sm:$0xff]
  %vm49 = vcmp.gt.f32.partialorder %v48, 0.0
  %v50 = vld [vmem:[%s2] sm:$0xff]
  %v51 = vld [vmem:[%s2 + $0x8] sm:$0xff]
  %v52 = vld [vmem:[%s2 + $0x10] sm:$0xff]
  %v53 = vld [vmem:[%s3] sm:$0xff]
  %v54 = vld [vmem:[%s3 + $0x8] sm:$0xff]
  %v55 = vld [vmem:[%s3 + $0x10] sm:$0xff]
  %v56 = vld [vmem:[%s0] sm:$0xff]
  %v57 = vpack.c.bf16 %v56, %v56
  %v58 = vld [vmem:[%s4] sm:$0xf]
  %v59 = vld [vmem:[%s4 + $0x4] sm:$0xf]
  %v62 = vunpack.c.l.b16 %v58
  %v63 = vunpack.c.l.b16 %v59
  %v64 = vpack.c.b16 %v63, %v62
  %vm66 = vcmask 130048
  %v68 = vsel %vm66, %v57, 0
  %70 = vmatprep.subr.bf16.mxu0 0
  %71 = vmatpush1.bf16.msra.mxu0 0
  %72 = vmatprep.subr.bf16.mxu0 0
  %73 = vmatpush1.bf16.msra.mxu0 0
  %74 = vmatprep.subr.bf16.mxu0 0
  %75 = vmatpush1.bf16.msra.mxu0 0
  %76 = vmatprep.subr.bf16.mxu0 0
  %77 = vmatpush1.bf16.msra.mxu0 0
  %78 = vmatprep.subr.bf16.mxu0 0
  %79 = vmatpush1.bf16.msra.mxu0 0
  %80 = vmatprep.subr.bf16.mxu0 0
  %81 = vmatpush1.bf16.msra.mxu0 0
  %82 = vmatprep.subr.bf16.mxu0 0
  %83 = vmatpush1.bf16.msra.mxu0 0
  %84 = vmatprep.subr.bf16.mxu0 0
  %85 = vmatpush1.bf16.msra.mxu0 %v64
  %86 = vmatprep.subr.bf16.mxu0 0
  %87 = vmatpush2.bf16.msra.mxu0 0
  %88 = vmatprep.subr.bf16.mxu0 0
  %89 = vmatpush2.bf16.msra.mxu0 0
  %90 = vmatprep.subr.bf16.mxu0 0
  %91 = vmatpush2.bf16.msra.mxu0 0
  %92 = vmatprep.subr.bf16.mxu0 0
  %93 = vmatpush2.bf16.msra.mxu0 0
  %94 = vmatprep.subr.bf16.mxu0 0
  %95 = vmatpush2.bf16.msra.mxu0 0
  %96 = vmatprep.subr.bf16.mxu0 0
  %97 = vmatpush2.bf16.msra.mxu0 0
  %98 = vmatprep.subr.bf16.mxu0 0
  %99 = vmatpush2.bf16.msra.mxu0 0
  %100 = vmatprep.subr.bf16.mxu0 0
  %101 = vmatpush2.bf16.msra.mxu0 0
  %102 = vmatprep.mubr.bf16.mxu0 0
  %103 = vmatmul.mubr.bf16.gmra.mxu0 %v68
  %v104 = vpop.f32.mrf.mxu0
  %v105 = vadd.f32 0.0, %v104
  %v106 = vpop.f32.mrf.mxu0
  %v107 = vpop.f32.mrf.mxu0
  %v108 = vpop.f32.mrf.mxu0
  %109 = vdwg.mxu0
  %v110 = vld [vmem:[%s5] sm:$0xff]
  %v111 = vld [vmem:[%s5 + $0x8] sm:$0xff]
  %v113 = vsel %vm66, %v56, 0
  %115 = vmatprep.subr.mxu0 0.0
  %116 = vmatpush1.msra.mxu0 0.0
  %117 = vmatprep.subr.mxu0 0.0
  %118 = vmatpush1.msra.mxu0 0.0
  %119 = vmatprep.subr.mxu0 0.0
  %120 = vmatpush1.msra.mxu0 0.0
  %121 = vmatprep.subr.mxu0 0.0
  %122 = vmatpush1.msra.mxu0 0.0
  %123 = vmatprep.subr.mxu0 0.0
  %124 = vmatpush1.msra.mxu0 0.0
  %125 = vmatprep.subr.mxu0 0.0
  %126 = vmatpush1.msra.mxu0 0.0
  %127 = vmatprep.subr.mxu0 0.0
  %128 = vmatpush1.msra.mxu0 0.0
  %129 = vmatprep.subr.mxu0 0.0
  %130 = vmatpush1.msra.mxu0 0.0
  %131 = vmatprep.subr.mxu0 0.0
  %132 = vmatpush1.msra.mxu0 0.0
  %133 = vmatprep.subr.mxu0 0.0
  %134 = vmatpush1.msra.mxu0 0.0
  %135 = vmatprep.subr.mxu0 0.0
  %136 = vmatpush1.msra.mxu0 0.0
  %137 = vmatprep.subr.mxu0 0.0
  %138 = vmatpush1.msra.mxu0 0.0
  %139 = vmatprep.subr.mxu0 0.0
  %140 = vmatpush1.msra.mxu0 0.0
  %141 = vmatprep.subr.mxu0 0.0
  %142 = vmatpush1.msra.mxu0 0.0
  %143 = vmatprep.subr.mxu0 0.0
  %144 = vmatpush1.msra.mxu0 %v111
  %145 = vmatprep.subr.mxu0 0.0
  %146 = vmatpush1.msra.mxu0 %v110
  %147 = vmatprep.subr.mxu0 0.0
  %148 = vmatpush2.msra.mxu0 0.0
  %149 = vmatprep.subr.mxu0 0.0
  %150 = vmatpush2.msra.mxu0 0.0
  %151 = vmatprep.subr.mxu0 0.0
  %152 = vmatpush2.msra.mxu0 0.0
  %153 = vmatprep.subr.mxu0 0.0
  %154 = vmatpush2.msra.mxu0 0.0
  %155 = vmatprep.subr.mxu0 0.0
  %156 = vmatpush2.msra.mxu0 0.0
  %157 = vmatprep.subr.mxu0 0.0
  %158 = vmatpush2.msra.mxu0 0.0
  %159 = vmatprep.subr.mxu0 0.0
  %160 = vmatpush2.msra.mxu0 0.0
  %161 = vmatprep.subr.mxu0 0.0
  %162 = vmatpush2.msra.mxu0 0.0
  %163 = vmatprep.subr.mxu0 0.0
  %164 = vmatpush2.msra.mxu0 0.0
  %165 = vmatprep.subr.mxu0 0.0
  %166 = vmatpush2.msra.mxu0 0.0
  %167 = vmatprep.subr.mxu0 0.0
  %168 = vmatpush2.msra.mxu0 0.0
  %169 = vmatprep.subr.mxu0 0.0
  %170 = vmatpush2.msra.mxu0 0.0
  %171 = vmatprep.subr.mxu0 0.0
  %172 = vmatpush2.msra.mxu0 0.0
  %173 = vmatprep.subr.mxu0 0.0
  %174 = vmatpush2.msra.mxu0 0.0
  %175 = vmatprep.subr.mxu0 0.0
  %176 = vmatpush2.msra.mxu0 0.0
  %177 = vmatprep.subr.mxu0 0.0
  %178 = vmatpush2.msra.mxu0 0.0
  %179 = vmatprep.mubr.f32.mxu0 0.0
  %180 = vmatmul.mubr.f32.gmra.mxu0 %v113
  %v181 = vpop.f32.mrf.mxu0
  %v182 = vadd.f32 0.0, %v181
  %v183 = vpop.f32.mrf.mxu0
  %184 = vdwg.mxu0
  %v185 = vld [vmem:[%s6] sm:$0xff]
  %v186 = vld [vmem:[%s6 + $0x8] sm:$0xff]
  %187 = vxpose.xlu0.b32.start [1/16] %v185, 128
  %188 = vxpose.xlu0.b32.cont [2/16] %v186, 128
  %189 = vxpose.xlu0.b32.cont [3/16] 0.0, 128
  %190 = vxpose.xlu0.b32.cont [4/16] 0.0, 128
  %191 = vxpose.xlu0.b32.cont [5/16] 0.0, 128
  %192 = vxpose.xlu0.b32.cont [6/16] 0.0, 128
  %193 = vxpose.xlu0.b32.cont [7/16] 0.0, 128
  %194 = vxpose.xlu0.b32.cont [8/16] 0.0, 128
  %195 = vxpose.xlu0.b32.cont [9/16] 0.0, 128
  %196 = vxpose.xlu0.b32.cont [10/16] 0.0, 128
  %197 = vxpose.xlu0.b32.cont [11/16] 0.0, 128
  %198 = vxpose.xlu0.b32.cont [12/16] 0.0, 128
  %199 = vxpose.xlu0.b32.cont [13/16] 0.0, 128
  %200 = vxpose.xlu0.b32.cont [14/16] 0.0, 128
  %201 = vxpose.xlu0.b32.cont [15/16] 0.0, 128
  %202 = vxpose.xlu0.b32.end [16/16] 0.0, 128
  %v203 = vpop.trf.xlu0
  %v204 = vpop.trf.xlu0
  %v205 = vpop.trf.xlu0
  %v206 = vpop.trf.xlu0
  %v207 = vpop.trf.xlu0
  %v208 = vpop.trf.xlu0
  %v209 = vpop.trf.xlu0
  %v210 = vpop.trf.xlu0
  %v211 = vpop.trf.xlu0
  %v212 = vpop.trf.xlu0
  %v213 = vpop.trf.xlu0
  %v214 = vpop.trf.xlu0
  %v215 = vpop.trf.xlu0
  %v216 = vpop.trf.xlu0
  %v217 = vpop.trf.xlu0
  %v218 = vpop.trf.xlu0
  %v220 = vsel %vm66, %v203, 0
  %222 = vmatprep.subr.mxu0 0.0
  %223 = vmatpush1.xpose.msra.mxu0 0.0
  %224 = vmatprep.subr.mxu0 0.0
  %225 = vmatpush1.xpose.msra.mxu0 0.0
  %226 = vmatprep.subr.mxu0 0.0
  %227 = vmatpush1.xpose.msra.mxu0 0.0
  %228 = vmatprep.subr.mxu0 0.0
  %229 = vmatpush1.xpose.msra.mxu0 0.0
  %230 = vmatprep.subr.mxu0 0.0
  %231 = vmatpush1.xpose.msra.mxu0 0.0
  %232 = vmatprep.subr.mxu0 0.0
  %233 = vmatpush1.xpose.msra.mxu0 0.0
  %234 = vmatprep.subr.mxu0 0.0
  %235 = vmatpush1.xpose.msra.mxu0 0.0
  %236 = vmatprep.subr.mxu0 0.0
  %237 = vmatpush1.xpose.msra.mxu0 0.0
  %238 = vmatprep.subr.mxu0 0.0
  %239 = vmatpush1.xpose.msra.mxu0 0.0
  %240 = vmatprep.subr.mxu0 0.0
  %241 = vmatpush1.xpose.msra.mxu0 0.0
  %242 = vmatprep.subr.mxu0 0.0
  %243 = vmatpush1.xpose.msra.mxu0 0.0
  %244 = vmatprep.subr.mxu0 0.0
  %245 = vmatpush1.xpose.msra.mxu0 0.0
  %246 = vmatprep.subr.mxu0 0.0
  %247 = vmatpush1.xpose.msra.mxu0 0.0
  %248 = vmatprep.subr.mxu0 0.0
  %249 = vmatpush1.xpose.msra.mxu0 0.0
  %250 = vmatprep.subr.mxu0 0.0
  %251 = vmatpush1.xpose.msra.mxu0 0.0
  %252 = vmatprep.subr.mxu0 0.0
  %253 = vmatpush1.xpose.msra.mxu0 %v113
  %254 = vmatprep.subr.mxu0 0.0
  %255 = vmatpush2.xpose.msra.mxu0 0.0
  %256 = vmatprep.subr.mxu0 0.0
  %257 = vmatpush2.xpose.msra.mxu0 0.0
  %258 = vmatprep.subr.mxu0 0.0
  %259 = vmatpush2.xpose.msra.mxu0 0.0
  %260 = vmatprep.subr.mxu0 0.0
  %261 = vmatpush2.xpose.msra.mxu0 0.0
  %262 = vmatprep.subr.mxu0 0.0
  %263 = vmatpush2.xpose.msra.mxu0 0.0
  %264 = vmatprep.subr.mxu0 0.0
  %265 = vmatpush2.xpose.msra.mxu0 0.0
  %266 = vmatprep.subr.mxu0 0.0
  %267 = vmatpush2.xpose.msra.mxu0 0.0
  %268 = vmatprep.subr.mxu0 0.0
  %269 = vmatpush2.xpose.msra.mxu0 0.0
  %270 = vmatprep.subr.mxu0 0.0
  %271 = vmatpush2.xpose.msra.mxu0 0.0
  %272 = vmatprep.subr.mxu0 0.0
  %273 = vmatpush2.xpose.msra.mxu0 0.0
  %274 = vmatprep.subr.mxu0 0.0
  %275 = vmatpush2.xpose.msra.mxu0 0.0
  %276 = vmatprep.subr.mxu0 0.0
  %277 = vmatpush2.xpose.msra.mxu0 0.0
  %278 = vmatprep.subr.mxu0 0.0
  %279 = vmatpush2.xpose.msra.mxu0 0.0
  %280 = vmatprep.subr.mxu0 0.0
  %281 = vmatpush2.xpose.msra.mxu0 0.0
  %282 = vmatprep.subr.mxu0 0.0
  %283 = vmatpush2.xpose.msra.mxu0 0.0
  %284 = vmatprep.subr.mxu0 0.0
  %285 = vmatpush2.xpose.msra.mxu0 0.0
  %286 = vmatprep.mubr.f32.mxu0 0.0
  %287 = vmatmul.mubr.f32.gmra.mxu0 %v220
  %v288 = vpop.f32.mrf.mxu0
  %v289 = vadd.f32 0.0, %v288
  %v290 = vpop.f32.mrf.mxu0
  %291 = vdwg.mxu0
  %293 = vset.pattern.permute.xlu0 0
  %294 = vperm.xlu0 %293, %v182
  %v295 = vpop.permute.xlu0 %294
  %v297 = vlaneseq
  %v298 = vshrl.u32 %v297, 7
  %v299 = vsub.s32 0, %v298
  %v300 = vrot.slane %v289, %v299
  %v301 = vadd.f32 %v295, %v300
  %vm302 = vcmp.ge.f32.partialorder %v301, 0.0
  %v303 = vmul.f32 %v301, 0.2
  %v304 = vsel %vm302, %v301, %v303
  %v305 = vsel %vm49, %v304, -1e+30
  %vm306 = vcmask 64512
  %v307 = vsel %vm306, %v305, -inf
  %v308 = vrot.slane %v307, 4
  %v309 = vmax.f32 %v307, %v308
  %v310 = vrot.slane %v309, 2
  %v311 = vmax.f32 %v309, %v310
  %v312 = vrot.slane %v311, 1
  %v313 = vmax.f32 %v311, %v312
  %v314 = vsub.f32 %v305, %v313
  %v315 = vmul.f32 %v314, 1.442695
  %v316 = vpow.pop %v315
  %v317 = vsel %vm306, %v316, 0.0
  %v318 = vrot.slane %v317, 4
  %v319 = vadd.f32 %v317, %v318
  %v320 = vrot.slane %v319, 2
  %v321 = vadd.f32 %v319, %v320
  %v322 = vrot.slane %v321, 1
  %v323 = vadd.f32 %v321, %v322
  %v324 = vmax.f32 %v323, 1e-30
  %v325 = vrcp.pop %v324
  %v326 = vmul.f32 %v316, %v325
  %v327 = vpack.c.bf16 %v326, %v326
  %v328 = vpack.c.bf16 %v105, %v105
  %329 = vxpose.xlu0.c.b16.start [1/8] %v327, 128
  %330 = vxpose.xlu0.c.b16.cont [2/8] 0, 128
  %331 = vxpose.xlu0.c.b16.cont [3/8] 0, 128
  %332 = vxpose.xlu0.c.b16.cont [4/8] 0, 128
  %333 = vxpose.xlu0.c.b16.cont [5/8] 0, 128
  %334 = vxpose.xlu0.c.b16.cont [6/8] 0, 128
  %335 = vxpose.xlu0.c.b16.cont [7/8] 0, 128
  %336 = vxpose.xlu0.c.b16.end [8/8] 0, 128
  %v337 = vpop.trf.xlu0
  %v338 = vpop.trf.xlu0
  %v339 = vpop.trf.xlu0
  %v340 = vpop.trf.xlu0
  %v341 = vpop.trf.xlu0
  %v342 = vpop.trf.xlu0
  %v343 = vpop.trf.xlu0
  %v344 = vpop.trf.xlu0
  %v346 = vsel %vm306, %v337, 0
  %vm348 = vcmask 1043456
  %v350 = vsel %vm348, %v328, 0
  %352 = vmatprep.subr.bf16.mxu0 0
  %353 = vmatpush1.bf16.msra.mxu0 0
  %354 = vmatprep.subr.bf16.mxu0 0
  %355 = vmatpush1.bf16.msra.mxu0 0
  %356 = vmatprep.subr.bf16.mxu0 0
  %357 = vmatpush1.bf16.msra.mxu0 0
  %358 = vmatprep.subr.bf16.mxu0 0
  %359 = vmatpush1.bf16.msra.mxu0 0
  %360 = vmatprep.subr.bf16.mxu0 0
  %361 = vmatpush1.bf16.msra.mxu0 0
  %362 = vmatprep.subr.bf16.mxu0 0
  %363 = vmatpush1.bf16.msra.mxu0 0
  %364 = vmatprep.subr.bf16.mxu0 0
  %365 = vmatpush1.bf16.msra.mxu0 0
  %366 = vmatprep.subr.bf16.mxu0 0
  %367 = vmatpush1.bf16.msra.mxu0 %v350
  %368 = vmatprep.subr.bf16.mxu0 0
  %369 = vmatpush2.bf16.msra.mxu0 0
  %370 = vmatprep.subr.bf16.mxu0 0
  %371 = vmatpush2.bf16.msra.mxu0 0
  %372 = vmatprep.subr.bf16.mxu0 0
  %373 = vmatpush2.bf16.msra.mxu0 0
  %374 = vmatprep.subr.bf16.mxu0 0
  %375 = vmatpush2.bf16.msra.mxu0 0
  %376 = vmatprep.subr.bf16.mxu0 0
  %377 = vmatpush2.bf16.msra.mxu0 0
  %378 = vmatprep.subr.bf16.mxu0 0
  %379 = vmatpush2.bf16.msra.mxu0 0
  %380 = vmatprep.subr.bf16.mxu0 0
  %381 = vmatpush2.bf16.msra.mxu0 0
  %382 = vmatprep.subr.bf16.mxu0 0
  %383 = vmatpush2.bf16.msra.mxu0 0
  %384 = vmatprep.mubr.bf16.mxu0 0
  %385 = vmatmul.mubr.bf16.gmra.mxu0 %v346
  %v386 = vpop.f32.mrf.mxu0
  %v387 = vadd.f32 0.0, %v386
  %v388 = vpop.f32.mrf.mxu0
  %v389 = vpop.f32.mrf.mxu0
  %v390 = vpop.f32.mrf.mxu0
  %391 = vdwg.mxu0
  %vm392 = vcmp.gt.f32.partialorder %v387, 0.0
  %v393 = vmul.f32 %v387, 1.442695
  %v394 = vpow.pop %v393
  %v395 = vsub.f32 %v394, 1.0
  %v396 = vsel %vm392, %v387, %v395
  %397 = vset.pattern.permute.xlu0 1
  %398 = vperm.xlu0 %397, %v182
  %v399 = vpop.permute.xlu0 %398
  %v401 = vlaneseq
  %v402 = vshrl.u32 %v401, 7
  %v403 = vsub.s32 1, %v402
  %v404 = vrot.slane %v289, %v403
  %v405 = vadd.f32 %v399, %v404
  %vm406 = vcmp.ge.f32.partialorder %v405, 0.0
  %v407 = vmul.f32 %v405, 0.2
  %v408 = vsel %vm406, %v405, %v407
  %v409 = vsel %vm49, %v408, -1e+30
  %v410 = vsel %vm306, %v409, -inf
  %v411 = vrot.slane %v410, 4
  %v412 = vmax.f32 %v410, %v411
  %v413 = vrot.slane %v412, 2
  %v414 = vmax.f32 %v412, %v413
  %v415 = vrot.slane %v414, 1
  %v416 = vmax.f32 %v414, %v415
  %v417 = vsub.f32 %v409, %v416
  %v418 = vmul.f32 %v417, 1.442695
  %v419 = vpow.pop %v418
  %v420 = vsel %vm306, %v419, 0.0
  %v421 = vrot.slane %v420, 4
  %v422 = vadd.f32 %v420, %v421
  %v423 = vrot.slane %v422, 2
  %v424 = vadd.f32 %v422, %v423
  %v425 = vrot.slane %v424, 1
  %v426 = vadd.f32 %v424, %v425
  %v427 = vmax.f32 %v426, 1e-30
  %v428 = vrcp.pop %v427
  %v429 = vmul.f32 %v419, %v428
  %v430 = vpack.c.bf16 %v429, %v429
  %431 = vxpose.xlu0.c.b16.start [1/8] %v430, 128
  %432 = vxpose.xlu0.c.b16.cont [2/8] 0, 128
  %433 = vxpose.xlu0.c.b16.cont [3/8] 0, 128
  %434 = vxpose.xlu0.c.b16.cont [4/8] 0, 128
  %435 = vxpose.xlu0.c.b16.cont [5/8] 0, 128
  %436 = vxpose.xlu0.c.b16.cont [6/8] 0, 128
  %437 = vxpose.xlu0.c.b16.cont [7/8] 0, 128
  %438 = vxpose.xlu0.c.b16.end [8/8] 0, 128
  %v439 = vpop.trf.xlu0
  %v440 = vpop.trf.xlu0
  %v441 = vpop.trf.xlu0
  %v442 = vpop.trf.xlu0
  %v443 = vpop.trf.xlu0
  %v444 = vpop.trf.xlu0
  %v445 = vpop.trf.xlu0
  %v446 = vpop.trf.xlu0
  %448 = vrot.lane.b32.xlu0 %v328, 120
  %v449 = vpop.permute.xlu0 %448
  %v451 = vsel %vm306, %v439, 0
  %v454 = vsel %vm348, %v449, 0
  %456 = vmatprep.subr.bf16.mxu0 0
  %457 = vmatpush1.bf16.msra.mxu0 0
  %458 = vmatprep.subr.bf16.mxu0 0
  %459 = vmatpush1.bf16.msra.mxu0 0
  %460 = vmatprep.subr.bf16.mxu0 0
  %461 = vmatpush1.bf16.msra.mxu0 0
  %462 = vmatprep.subr.bf16.mxu0 0
  %463 = vmatpush1.bf16.msra.mxu0 0
  %464 = vmatprep.subr.bf16.mxu0 0
  %465 = vmatpush1.bf16.msra.mxu0 0
  %466 = vmatprep.subr.bf16.mxu0 0
  %467 = vmatpush1.bf16.msra.mxu0 0
  %468 = vmatprep.subr.bf16.mxu0 0
  %469 = vmatpush1.bf16.msra.mxu0 0
  %470 = vmatprep.subr.bf16.mxu0 0
  %471 = vmatpush1.bf16.msra.mxu0 %v454
  %472 = vmatprep.subr.bf16.mxu0 0
  %473 = vmatpush2.bf16.msra.mxu0 0
  %474 = vmatprep.subr.bf16.mxu0 0
  %475 = vmatpush2.bf16.msra.mxu0 0
  %476 = vmatprep.subr.bf16.mxu0 0
  %477 = vmatpush2.bf16.msra.mxu0 0
  %478 = vmatprep.subr.bf16.mxu0 0
  %479 = vmatpush2.bf16.msra.mxu0 0
  %480 = vmatprep.subr.bf16.mxu0 0
  %481 = vmatpush2.bf16.msra.mxu0 0
  %482 = vmatprep.subr.bf16.mxu0 0
  %483 = vmatpush2.bf16.msra.mxu0 0
  %484 = vmatprep.subr.bf16.mxu0 0
  %485 = vmatpush2.bf16.msra.mxu0 0
  %486 = vmatprep.subr.bf16.mxu0 0
  %487 = vmatpush2.bf16.msra.mxu0 0
  %488 = vmatprep.mubr.bf16.mxu0 0
  %489 = vmatmul.mubr.bf16.gmra.mxu0 %v451
  %v490 = vpop.f32.mrf.mxu0
  %v491 = vadd.f32 0.0, %v490
  %v492 = vpop.f32.mrf.mxu0
  %v493 = vpop.f32.mrf.mxu0
  %v494 = vpop.f32.mrf.mxu0
  %495 = vdwg.mxu0
  %vm496 = vcmp.gt.f32.partialorder %v491, 0.0
  %v497 = vmul.f32 %v491, 1.442695
  %v498 = vpow.pop %v497
  %v499 = vsub.f32 %v498, 1.0
  %v500 = vsel %vm496, %v491, %v499
  %502 = vrot.lane.b32.xlu0 %v500, 8
  %v503 = vpop.permute.xlu0 %502
  %v505 = vsel %vm306, %v396, %v503
  %v506 = vpack.c.bf16 %v505, %v505
  %v507 = vld [vmem:[%s7] sm:$0xf]
  %v508 = vld [vmem:[%s7 + $0x4] sm:$0xf]
  %v511 = vunpack.c.l.b16 %v507
  %v512 = vunpack.c.l.b16 %v508
  %v513 = vpack.c.b16 %v512, %v511
  %v516 = vsel %vm66, %v506, 0
  %518 = vmatprep.subr.bf16.mxu0 0
  %519 = vmatpush1.bf16.msra.mxu0 0
  %520 = vmatprep.subr.bf16.mxu0 0
  %521 = vmatpush1.bf16.msra.mxu0 0
  %522 = vmatprep.subr.bf16.mxu0 0
  %523 = vmatpush1.bf16.msra.mxu0 0
  %524 = vmatprep.subr.bf16.mxu0 0
  %525 = vmatpush1.bf16.msra.mxu0 0
  %526 = vmatprep.subr.bf16.mxu0 0
  %527 = vmatpush1.bf16.msra.mxu0 0
  %528 = vmatprep.subr.bf16.mxu0 0
  %529 = vmatpush1.bf16.msra.mxu0 0
  %530 = vmatprep.subr.bf16.mxu0 0
  %531 = vmatpush1.bf16.msra.mxu0 0
  %532 = vmatprep.subr.bf16.mxu0 0
  %533 = vmatpush1.bf16.msra.mxu0 %v513
  %534 = vmatprep.subr.bf16.mxu0 0
  %535 = vmatpush2.bf16.msra.mxu0 0
  %536 = vmatprep.subr.bf16.mxu0 0
  %537 = vmatpush2.bf16.msra.mxu0 0
  %538 = vmatprep.subr.bf16.mxu0 0
  %539 = vmatpush2.bf16.msra.mxu0 0
  %540 = vmatprep.subr.bf16.mxu0 0
  %541 = vmatpush2.bf16.msra.mxu0 0
  %542 = vmatprep.subr.bf16.mxu0 0
  %543 = vmatpush2.bf16.msra.mxu0 0
  %544 = vmatprep.subr.bf16.mxu0 0
  %545 = vmatpush2.bf16.msra.mxu0 0
  %546 = vmatprep.subr.bf16.mxu0 0
  %547 = vmatpush2.bf16.msra.mxu0 0
  %548 = vmatprep.subr.bf16.mxu0 0
  %549 = vmatpush2.bf16.msra.mxu0 0
  %550 = vmatprep.mubr.bf16.mxu0 0
  %551 = vmatmul.mubr.bf16.gmra.mxu0 %v516
  %v552 = vpop.f32.mrf.mxu0
  %v553 = vadd.f32 0.0, %v552
  %v554 = vpop.f32.mrf.mxu0
  %v555 = vpop.f32.mrf.mxu0
  %v556 = vpop.f32.mrf.mxu0
  %557 = vdwg.mxu0
  %v558 = vld [vmem:[%s8] sm:$0xff]
  %v559 = vld [vmem:[%s8 + $0x8] sm:$0xff]
  %v561 = vsel %vm66, %v505, 0
  %563 = vmatprep.subr.mxu0 0.0
  %564 = vmatpush1.msra.mxu0 0.0
  %565 = vmatprep.subr.mxu0 0.0
  %566 = vmatpush1.msra.mxu0 0.0
  %567 = vmatprep.subr.mxu0 0.0
  %568 = vmatpush1.msra.mxu0 0.0
  %569 = vmatprep.subr.mxu0 0.0
  %570 = vmatpush1.msra.mxu0 0.0
  %571 = vmatprep.subr.mxu0 0.0
  %572 = vmatpush1.msra.mxu0 0.0
  %573 = vmatprep.subr.mxu0 0.0
  %574 = vmatpush1.msra.mxu0 0.0
  %575 = vmatprep.subr.mxu0 0.0
  %576 = vmatpush1.msra.mxu0 0.0
  %577 = vmatprep.subr.mxu0 0.0
  %578 = vmatpush1.msra.mxu0 0.0
  %579 = vmatprep.subr.mxu0 0.0
  %580 = vmatpush1.msra.mxu0 0.0
  %581 = vmatprep.subr.mxu0 0.0
  %582 = vmatpush1.msra.mxu0 0.0
  %583 = vmatprep.subr.mxu0 0.0
  %584 = vmatpush1.msra.mxu0 0.0
  %585 = vmatprep.subr.mxu0 0.0
  %586 = vmatpush1.msra.mxu0 0.0
  %587 = vmatprep.subr.mxu0 0.0
  %588 = vmatpush1.msra.mxu0 0.0
  %589 = vmatprep.subr.mxu0 0.0
  %590 = vmatpush1.msra.mxu0 0.0
  %591 = vmatprep.subr.mxu0 0.0
  %592 = vmatpush1.msra.mxu0 %v559
  %593 = vmatprep.subr.mxu0 0.0
  %594 = vmatpush1.msra.mxu0 %v558
  %595 = vmatprep.subr.mxu0 0.0
  %596 = vmatpush2.msra.mxu0 0.0
  %597 = vmatprep.subr.mxu0 0.0
  %598 = vmatpush2.msra.mxu0 0.0
  %599 = vmatprep.subr.mxu0 0.0
  %600 = vmatpush2.msra.mxu0 0.0
  %601 = vmatprep.subr.mxu0 0.0
  %602 = vmatpush2.msra.mxu0 0.0
  %603 = vmatprep.subr.mxu0 0.0
  %604 = vmatpush2.msra.mxu0 0.0
  %605 = vmatprep.subr.mxu0 0.0
  %606 = vmatpush2.msra.mxu0 0.0
  %607 = vmatprep.subr.mxu0 0.0
  %608 = vmatpush2.msra.mxu0 0.0
  %609 = vmatprep.subr.mxu0 0.0
  %610 = vmatpush2.msra.mxu0 0.0
  %611 = vmatprep.subr.mxu0 0.0
  %612 = vmatpush2.msra.mxu0 0.0
  %613 = vmatprep.subr.mxu0 0.0
  %614 = vmatpush2.msra.mxu0 0.0
  %615 = vmatprep.subr.mxu0 0.0
  %616 = vmatpush2.msra.mxu0 0.0
  %617 = vmatprep.subr.mxu0 0.0
  %618 = vmatpush2.msra.mxu0 0.0
  %619 = vmatprep.subr.mxu0 0.0
  %620 = vmatpush2.msra.mxu0 0.0
  %621 = vmatprep.subr.mxu0 0.0
  %622 = vmatpush2.msra.mxu0 0.0
  %623 = vmatprep.subr.mxu0 0.0
  %624 = vmatpush2.msra.mxu0 0.0
  %625 = vmatprep.subr.mxu0 0.0
  %626 = vmatpush2.msra.mxu0 0.0
  %627 = vmatprep.mubr.f32.mxu0 0.0
  %628 = vmatmul.mubr.f32.gmra.mxu0 %v561
  %v629 = vpop.f32.mrf.mxu0
  %v630 = vadd.f32 0.0, %v629
  %v631 = vpop.f32.mrf.mxu0
  %632 = vdwg.mxu0
  %v633 = vld [vmem:[%s9] sm:$0xff]
  %v634 = vld [vmem:[%s9 + $0x8] sm:$0xff]
  %635 = vxpose.xlu0.b32.start [1/16] %v633, 128
  %636 = vxpose.xlu0.b32.cont [2/16] %v634, 128
  %637 = vxpose.xlu0.b32.cont [3/16] 0.0, 128
  %638 = vxpose.xlu0.b32.cont [4/16] 0.0, 128
  %639 = vxpose.xlu0.b32.cont [5/16] 0.0, 128
  %640 = vxpose.xlu0.b32.cont [6/16] 0.0, 128
  %641 = vxpose.xlu0.b32.cont [7/16] 0.0, 128
  %642 = vxpose.xlu0.b32.cont [8/16] 0.0, 128
  %643 = vxpose.xlu0.b32.cont [9/16] 0.0, 128
  %644 = vxpose.xlu0.b32.cont [10/16] 0.0, 128
  %645 = vxpose.xlu0.b32.cont [11/16] 0.0, 128
  %646 = vxpose.xlu0.b32.cont [12/16] 0.0, 128
  %647 = vxpose.xlu0.b32.cont [13/16] 0.0, 128
  %648 = vxpose.xlu0.b32.cont [14/16] 0.0, 128
  %649 = vxpose.xlu0.b32.cont [15/16] 0.0, 128
  %650 = vxpose.xlu0.b32.end [16/16] 0.0, 128
  %v651 = vpop.trf.xlu0
  %v652 = vpop.trf.xlu0
  %v653 = vpop.trf.xlu0
  %v654 = vpop.trf.xlu0
  %v655 = vpop.trf.xlu0
  %v656 = vpop.trf.xlu0
  %v657 = vpop.trf.xlu0
  %v658 = vpop.trf.xlu0
  %v659 = vpop.trf.xlu0
  %v660 = vpop.trf.xlu0
  %v661 = vpop.trf.xlu0
  %v662 = vpop.trf.xlu0
  %v663 = vpop.trf.xlu0
  %v664 = vpop.trf.xlu0
  %v665 = vpop.trf.xlu0
  %v666 = vpop.trf.xlu0
  %v668 = vsel %vm66, %v651, 0
  %670 = vmatprep.subr.mxu0 0.0
  %671 = vmatpush1.xpose.msra.mxu0 0.0
  %672 = vmatprep.subr.mxu0 0.0
  %673 = vmatpush1.xpose.msra.mxu0 0.0
  %674 = vmatprep.subr.mxu0 0.0
  %675 = vmatpush1.xpose.msra.mxu0 0.0
  %676 = vmatprep.subr.mxu0 0.0
  %677 = vmatpush1.xpose.msra.mxu0 0.0
  %678 = vmatprep.subr.mxu0 0.0
  %679 = vmatpush1.xpose.msra.mxu0 0.0
  %680 = vmatprep.subr.mxu0 0.0
  %681 = vmatpush1.xpose.msra.mxu0 0.0
  %682 = vmatprep.subr.mxu0 0.0
  %683 = vmatpush1.xpose.msra.mxu0 0.0
  %684 = vmatprep.subr.mxu0 0.0
  %685 = vmatpush1.xpose.msra.mxu0 0.0
  %686 = vmatprep.subr.mxu0 0.0
  %687 = vmatpush1.xpose.msra.mxu0 0.0
  %688 = vmatprep.subr.mxu0 0.0
  %689 = vmatpush1.xpose.msra.mxu0 0.0
  %690 = vmatprep.subr.mxu0 0.0
  %691 = vmatpush1.xpose.msra.mxu0 0.0
  %692 = vmatprep.subr.mxu0 0.0
  %693 = vmatpush1.xpose.msra.mxu0 0.0
  %694 = vmatprep.subr.mxu0 0.0
  %695 = vmatpush1.xpose.msra.mxu0 0.0
  %696 = vmatprep.subr.mxu0 0.0
  %697 = vmatpush1.xpose.msra.mxu0 0.0
  %698 = vmatprep.subr.mxu0 0.0
  %699 = vmatpush1.xpose.msra.mxu0 0.0
  %700 = vmatprep.subr.mxu0 0.0
  %701 = vmatpush1.xpose.msra.mxu0 %v561
  %702 = vmatprep.subr.mxu0 0.0
  %703 = vmatpush2.xpose.msra.mxu0 0.0
  %704 = vmatprep.subr.mxu0 0.0
  %705 = vmatpush2.xpose.msra.mxu0 0.0
  %706 = vmatprep.subr.mxu0 0.0
  %707 = vmatpush2.xpose.msra.mxu0 0.0
  %708 = vmatprep.subr.mxu0 0.0
  %709 = vmatpush2.xpose.msra.mxu0 0.0
  %710 = vmatprep.subr.mxu0 0.0
  %711 = vmatpush2.xpose.msra.mxu0 0.0
  %712 = vmatprep.subr.mxu0 0.0
  %713 = vmatpush2.xpose.msra.mxu0 0.0
  %714 = vmatprep.subr.mxu0 0.0
  %715 = vmatpush2.xpose.msra.mxu0 0.0
  %716 = vmatprep.subr.mxu0 0.0
  %717 = vmatpush2.xpose.msra.mxu0 0.0
  %718 = vmatprep.subr.mxu0 0.0
  %719 = vmatpush2.xpose.msra.mxu0 0.0
  %720 = vmatprep.subr.mxu0 0.0
  %721 = vmatpush2.xpose.msra.mxu0 0.0
  %722 = vmatprep.subr.mxu0 0.0
  %723 = vmatpush2.xpose.msra.mxu0 0.0
  %724 = vmatprep.subr.mxu0 0.0
  %725 = vmatpush2.xpose.msra.mxu0 0.0
  %726 = vmatprep.subr.mxu0 0.0
  %727 = vmatpush2.xpose.msra.mxu0 0.0
  %728 = vmatprep.subr.mxu0 0.0
  %729 = vmatpush2.xpose.msra.mxu0 0.0
  %730 = vmatprep.subr.mxu0 0.0
  %731 = vmatpush2.xpose.msra.mxu0 0.0
  %732 = vmatprep.subr.mxu0 0.0
  %733 = vmatpush2.xpose.msra.mxu0 0.0
  %734 = vmatprep.mubr.f32.mxu0 0.0
  %735 = vmatmul.mubr.f32.gmra.mxu0 %v668
  %v736 = vpop.f32.mrf.mxu0
  %v737 = vadd.f32 0.0, %v736
  %v738 = vpop.f32.mrf.mxu0
  %739 = vdwg.mxu0
  %741 = vset.pattern.permute.xlu0 0
  %742 = vperm.xlu0 %741, %v630
  %v743 = vpop.permute.xlu0 %742
  %v745 = vlaneseq
  %v746 = vshrl.u32 %v745, 7
  %v747 = vsub.s32 0, %v746
  %v748 = vrot.slane %v737, %v747
  %v749 = vadd.f32 %v743, %v748
  %vm750 = vcmp.ge.f32.partialorder %v749, 0.0
  %v751 = vmul.f32 %v749, 0.2
  %v752 = vsel %vm750, %v749, %v751
  %v753 = vsel %vm49, %v752, -1e+30
  %v754 = vsel %vm306, %v753, -inf
  %v755 = vrot.slane %v754, 4
  %v756 = vmax.f32 %v754, %v755
  %v757 = vrot.slane %v756, 2
  %v758 = vmax.f32 %v756, %v757
  %v759 = vrot.slane %v758, 1
  %v760 = vmax.f32 %v758, %v759
  %v761 = vsub.f32 %v753, %v760
  %v762 = vmul.f32 %v761, 1.442695
  %v763 = vpow.pop %v762
  %v764 = vsel %vm306, %v763, 0.0
  %v765 = vrot.slane %v764, 4
  %v766 = vadd.f32 %v764, %v765
  %v767 = vrot.slane %v766, 2
  %v768 = vadd.f32 %v766, %v767
  %v769 = vrot.slane %v768, 1
  %v770 = vadd.f32 %v768, %v769
  %v771 = vmax.f32 %v770, 1e-30
  %v772 = vrcp.pop %v771
  %v773 = vmul.f32 %v763, %v772
  %v774 = vpack.c.bf16 %v773, %v773
  %v775 = vpack.c.bf16 %v553, %v553
  %776 = vxpose.xlu0.c.b16.start [1/8] %v774, 128
  %777 = vxpose.xlu0.c.b16.cont [2/8] 0, 128
  %778 = vxpose.xlu0.c.b16.cont [3/8] 0, 128
  %779 = vxpose.xlu0.c.b16.cont [4/8] 0, 128
  %780 = vxpose.xlu0.c.b16.cont [5/8] 0, 128
  %781 = vxpose.xlu0.c.b16.cont [6/8] 0, 128
  %782 = vxpose.xlu0.c.b16.cont [7/8] 0, 128
  %783 = vxpose.xlu0.c.b16.end [8/8] 0, 128
  %v784 = vpop.trf.xlu0
  %v785 = vpop.trf.xlu0
  %v786 = vpop.trf.xlu0
  %v787 = vpop.trf.xlu0
  %v788 = vpop.trf.xlu0
  %v789 = vpop.trf.xlu0
  %v790 = vpop.trf.xlu0
  %v791 = vpop.trf.xlu0
  %v793 = vsel %vm306, %v784, 0
  %v796 = vsel %vm348, %v775, 0
  %798 = vmatprep.subr.bf16.mxu0 0
  %799 = vmatpush1.bf16.msra.mxu0 0
  %800 = vmatprep.subr.bf16.mxu0 0
  %801 = vmatpush1.bf16.msra.mxu0 0
  %802 = vmatprep.subr.bf16.mxu0 0
  %803 = vmatpush1.bf16.msra.mxu0 0
  %804 = vmatprep.subr.bf16.mxu0 0
  %805 = vmatpush1.bf16.msra.mxu0 0
  %806 = vmatprep.subr.bf16.mxu0 0
  %807 = vmatpush1.bf16.msra.mxu0 0
  %808 = vmatprep.subr.bf16.mxu0 0
  %809 = vmatpush1.bf16.msra.mxu0 0
  %810 = vmatprep.subr.bf16.mxu0 0
  %811 = vmatpush1.bf16.msra.mxu0 0
  %812 = vmatprep.subr.bf16.mxu0 0
  %813 = vmatpush1.bf16.msra.mxu0 %v796
  %814 = vmatprep.subr.bf16.mxu0 0
  %815 = vmatpush2.bf16.msra.mxu0 0
  %816 = vmatprep.subr.bf16.mxu0 0
  %817 = vmatpush2.bf16.msra.mxu0 0
  %818 = vmatprep.subr.bf16.mxu0 0
  %819 = vmatpush2.bf16.msra.mxu0 0
  %820 = vmatprep.subr.bf16.mxu0 0
  %821 = vmatpush2.bf16.msra.mxu0 0
  %822 = vmatprep.subr.bf16.mxu0 0
  %823 = vmatpush2.bf16.msra.mxu0 0
  %824 = vmatprep.subr.bf16.mxu0 0
  %825 = vmatpush2.bf16.msra.mxu0 0
  %826 = vmatprep.subr.bf16.mxu0 0
  %827 = vmatpush2.bf16.msra.mxu0 0
  %828 = vmatprep.subr.bf16.mxu0 0
  %829 = vmatpush2.bf16.msra.mxu0 0
  %830 = vmatprep.mubr.bf16.mxu0 0
  %831 = vmatmul.mubr.bf16.gmra.mxu0 %v793
  %v832 = vpop.f32.mrf.mxu0
  %v833 = vadd.f32 0.0, %v832
  %v834 = vpop.f32.mrf.mxu0
  %v835 = vpop.f32.mrf.mxu0
  %v836 = vpop.f32.mrf.mxu0
  %837 = vdwg.mxu0
  %vm838 = vcmp.gt.f32.partialorder %v833, 0.0
  %v839 = vmul.f32 %v833, 1.442695
  %v840 = vpow.pop %v839
  %v841 = vsub.f32 %v840, 1.0
  %v842 = vsel %vm838, %v833, %v841
  %843 = vset.pattern.permute.xlu0 1
  %844 = vperm.xlu0 %843, %v630
  %v845 = vpop.permute.xlu0 %844
  %v847 = vlaneseq
  %v848 = vshrl.u32 %v847, 7
  %v849 = vsub.s32 1, %v848
  %v850 = vrot.slane %v737, %v849
  %v851 = vadd.f32 %v845, %v850
  %vm852 = vcmp.ge.f32.partialorder %v851, 0.0
  %v853 = vmul.f32 %v851, 0.2
  %v854 = vsel %vm852, %v851, %v853
  %v855 = vsel %vm49, %v854, -1e+30
  %v856 = vsel %vm306, %v855, -inf
  %v857 = vrot.slane %v856, 4
  %v858 = vmax.f32 %v856, %v857
  %v859 = vrot.slane %v858, 2
  %v860 = vmax.f32 %v858, %v859
  %v861 = vrot.slane %v860, 1
  %v862 = vmax.f32 %v860, %v861
  %v863 = vsub.f32 %v855, %v862
  %v864 = vmul.f32 %v863, 1.442695
  %v865 = vpow.pop %v864
  %v866 = vsel %vm306, %v865, 0.0
  %v867 = vrot.slane %v866, 4
  %v868 = vadd.f32 %v866, %v867
  %v869 = vrot.slane %v868, 2
  %v870 = vadd.f32 %v868, %v869
  %v871 = vrot.slane %v870, 1
  %v872 = vadd.f32 %v870, %v871
  %v873 = vmax.f32 %v872, 1e-30
  %v874 = vrcp.pop %v873
  %v875 = vmul.f32 %v865, %v874
  %v876 = vpack.c.bf16 %v875, %v875
  %877 = vxpose.xlu0.c.b16.start [1/8] %v876, 128
  %878 = vxpose.xlu0.c.b16.cont [2/8] 0, 128
  %879 = vxpose.xlu0.c.b16.cont [3/8] 0, 128
  %880 = vxpose.xlu0.c.b16.cont [4/8] 0, 128
  %881 = vxpose.xlu0.c.b16.cont [5/8] 0, 128
  %882 = vxpose.xlu0.c.b16.cont [6/8] 0, 128
  %883 = vxpose.xlu0.c.b16.cont [7/8] 0, 128
  %884 = vxpose.xlu0.c.b16.end [8/8] 0, 128
  %v885 = vpop.trf.xlu0
  %v886 = vpop.trf.xlu0
  %v887 = vpop.trf.xlu0
  %v888 = vpop.trf.xlu0
  %v889 = vpop.trf.xlu0
  %v890 = vpop.trf.xlu0
  %v891 = vpop.trf.xlu0
  %v892 = vpop.trf.xlu0
  %894 = vrot.lane.b32.xlu0 %v775, 120
  %v895 = vpop.permute.xlu0 %894
  %v897 = vsel %vm306, %v885, 0
  %v900 = vsel %vm348, %v895, 0
  %902 = vmatprep.subr.bf16.mxu0 0
  %903 = vmatpush1.bf16.msra.mxu0 0
  %904 = vmatprep.subr.bf16.mxu0 0
  %905 = vmatpush1.bf16.msra.mxu0 0
  %906 = vmatprep.subr.bf16.mxu0 0
  %907 = vmatpush1.bf16.msra.mxu0 0
  %908 = vmatprep.subr.bf16.mxu0 0
  %909 = vmatpush1.bf16.msra.mxu0 0
  %910 = vmatprep.subr.bf16.mxu0 0
  %911 = vmatpush1.bf16.msra.mxu0 0
  %912 = vmatprep.subr.bf16.mxu0 0
  %913 = vmatpush1.bf16.msra.mxu0 0
  %914 = vmatprep.subr.bf16.mxu0 0
  %915 = vmatpush1.bf16.msra.mxu0 0
  %916 = vmatprep.subr.bf16.mxu0 0
  %917 = vmatpush1.bf16.msra.mxu0 %v900
  %918 = vmatprep.subr.bf16.mxu0 0
  %919 = vmatpush2.bf16.msra.mxu0 0
  %920 = vmatprep.subr.bf16.mxu0 0
  %921 = vmatpush2.bf16.msra.mxu0 0
  %922 = vmatprep.subr.bf16.mxu0 0
  %923 = vmatpush2.bf16.msra.mxu0 0
  %924 = vmatprep.subr.bf16.mxu0 0
  %925 = vmatpush2.bf16.msra.mxu0 0
  %926 = vmatprep.subr.bf16.mxu0 0
  %927 = vmatpush2.bf16.msra.mxu0 0
  %928 = vmatprep.subr.bf16.mxu0 0
  %929 = vmatpush2.bf16.msra.mxu0 0
  %930 = vmatprep.subr.bf16.mxu0 0
  %931 = vmatpush2.bf16.msra.mxu0 0
  %932 = vmatprep.subr.bf16.mxu0 0
  %933 = vmatpush2.bf16.msra.mxu0 0
  %934 = vmatprep.mubr.bf16.mxu0 0
  %935 = vmatmul.mubr.bf16.gmra.mxu0 %v897
  %v936 = vpop.f32.mrf.mxu0
  %v937 = vadd.f32 0.0, %v936
  %v938 = vpop.f32.mrf.mxu0
  %v939 = vpop.f32.mrf.mxu0
  %v940 = vpop.f32.mrf.mxu0
  %941 = vdwg.mxu0
  %vm942 = vcmp.gt.f32.partialorder %v937, 0.0
  %v943 = vmul.f32 %v937, 1.442695
  %v944 = vpow.pop %v943
  %v945 = vsub.f32 %v944, 1.0
  %v946 = vsel %vm942, %v937, %v945
  %948 = vrot.lane.b32.xlu0 %v946, 8
  %v949 = vpop.permute.xlu0 %948
  %v951 = vsel %vm306, %v842, %v949
  %v952 = vmul.f32 %v951, %v951
  %v953 = vsel %vm66, %v952, 0.0
  %954 = vadd.xlane.f32.xlu0 %v953
  %v955 = vpop.xlane.xlu0 %954
  %v956 = vrsqrt.pop %v955
  %v957 = vmul.f32 %v955, %v956
  %vm958 = vcmp.eq.f32.partialorder %v955, inf
  %v959 = vsel %vm958, %v955, %v957
  %vm960 = vcmp.eq.f32.partialorder %v955, 0.0
  %v961 = vand.u32 %v955, 2147483648
  %v962 = vsel %vm960, %v961, %v959
  %vm963 = vcmask 7168
  %964 = vst.msk [vmem:[%s15] sm:$0xff] %vm963, %v962
  %v965 = vpack.c.bf16 %v951, %v951
  %v966 = vld [vmem:[%s10] sm:$0xf]
  %v967 = vld [vmem:[%s10 + $0x4] sm:$0xf]
  %v970 = vunpack.c.l.b16 %v966
  %v971 = vunpack.c.l.b16 %v967
  %v972 = vpack.c.b16 %v971, %v970
  %v975 = vsel %vm66, %v965, 0
  %977 = vmatprep.subr.bf16.mxu0 0
  %978 = vmatpush1.bf16.msra.mxu0 0
  %979 = vmatprep.subr.bf16.mxu0 0
  %980 = vmatpush1.bf16.msra.mxu0 0
  %981 = vmatprep.subr.bf16.mxu0 0
  %982 = vmatpush1.bf16.msra.mxu0 0
  %983 = vmatprep.subr.bf16.mxu0 0
  %984 = vmatpush1.bf16.msra.mxu0 0
  %985 = vmatprep.subr.bf16.mxu0 0
  %986 = vmatpush1.bf16.msra.mxu0 0
  %987 = vmatprep.subr.bf16.mxu0 0
  %988 = vmatpush1.bf16.msra.mxu0 0
  %989 = vmatprep.subr.bf16.mxu0 0
  %990 = vmatpush1.bf16.msra.mxu0 0
  %991 = vmatprep.subr.bf16.mxu0 0
  %992 = vmatpush1.bf16.msra.mxu0 %v972
  %993 = vmatprep.subr.bf16.mxu0 0
  %994 = vmatpush2.bf16.msra.mxu0 0
  %995 = vmatprep.subr.bf16.mxu0 0
  %996 = vmatpush2.bf16.msra.mxu0 0
  %997 = vmatprep.subr.bf16.mxu0 0
  %998 = vmatpush2.bf16.msra.mxu0 0
  %999 = vmatprep.subr.bf16.mxu0 0
  %1000 = vmatpush2.bf16.msra.mxu0 0
  %1001 = vmatprep.subr.bf16.mxu0 0
  %1002 = vmatpush2.bf16.msra.mxu0 0
  %1003 = vmatprep.subr.bf16.mxu0 0
  %1004 = vmatpush2.bf16.msra.mxu0 0
  %1005 = vmatprep.subr.bf16.mxu0 0
  %1006 = vmatpush2.bf16.msra.mxu0 0
  %1007 = vmatprep.subr.bf16.mxu0 0
  %1008 = vmatpush2.bf16.msra.mxu0 0
  %1009 = vmatprep.mubr.bf16.mxu0 0
  %1010 = vmatmul.mubr.bf16.gmra.mxu0 %v975
  %v1011 = vpop.f32.mrf.mxu0
  %v1012 = vadd.f32 0.0, %v1011
  %v1013 = vpop.f32.mrf.mxu0
  %v1014 = vpop.f32.mrf.mxu0
  %v1015 = vpop.f32.mrf.mxu0
  %1016 = vdwg.mxu0
  %v1017 = vld [vmem:[%s11] sm:$0xff]
  %v1018 = vld [vmem:[%s11 + $0x8] sm:$0xff]
  %v1020 = vsel %vm66, %v951, 0
  %1022 = vmatprep.subr.mxu0 0.0
  %1023 = vmatpush1.msra.mxu0 0.0
  %1024 = vmatprep.subr.mxu0 0.0
  %1025 = vmatpush1.msra.mxu0 0.0
  %1026 = vmatprep.subr.mxu0 0.0
  %1027 = vmatpush1.msra.mxu0 0.0
  %1028 = vmatprep.subr.mxu0 0.0
  %1029 = vmatpush1.msra.mxu0 0.0
  %1030 = vmatprep.subr.mxu0 0.0
  %1031 = vmatpush1.msra.mxu0 0.0
  %1032 = vmatprep.subr.mxu0 0.0
  %1033 = vmatpush1.msra.mxu0 0.0
  %1034 = vmatprep.subr.mxu0 0.0
  %1035 = vmatpush1.msra.mxu0 0.0
  %1036 = vmatprep.subr.mxu0 0.0
  %1037 = vmatpush1.msra.mxu0 0.0
  %1038 = vmatprep.subr.mxu0 0.0
  %1039 = vmatpush1.msra.mxu0 0.0
  %1040 = vmatprep.subr.mxu0 0.0
  %1041 = vmatpush1.msra.mxu0 0.0
  %1042 = vmatprep.subr.mxu0 0.0
  %1043 = vmatpush1.msra.mxu0 0.0
  %1044 = vmatprep.subr.mxu0 0.0
  %1045 = vmatpush1.msra.mxu0 0.0
  %1046 = vmatprep.subr.mxu0 0.0
  %1047 = vmatpush1.msra.mxu0 0.0
  %1048 = vmatprep.subr.mxu0 0.0
  %1049 = vmatpush1.msra.mxu0 0.0
  %1050 = vmatprep.subr.mxu0 0.0
  %1051 = vmatpush1.msra.mxu0 %v1018
  %1052 = vmatprep.subr.mxu0 0.0
  %1053 = vmatpush1.msra.mxu0 %v1017
  %1054 = vmatprep.subr.mxu0 0.0
  %1055 = vmatpush2.msra.mxu0 0.0
  %1056 = vmatprep.subr.mxu0 0.0
  %1057 = vmatpush2.msra.mxu0 0.0
  %1058 = vmatprep.subr.mxu0 0.0
  %1059 = vmatpush2.msra.mxu0 0.0
  %1060 = vmatprep.subr.mxu0 0.0
  %1061 = vmatpush2.msra.mxu0 0.0
  %1062 = vmatprep.subr.mxu0 0.0
  %1063 = vmatpush2.msra.mxu0 0.0
  %1064 = vmatprep.subr.mxu0 0.0
  %1065 = vmatpush2.msra.mxu0 0.0
  %1066 = vmatprep.subr.mxu0 0.0
  %1067 = vmatpush2.msra.mxu0 0.0
  %1068 = vmatprep.subr.mxu0 0.0
  %1069 = vmatpush2.msra.mxu0 0.0
  %1070 = vmatprep.subr.mxu0 0.0
  %1071 = vmatpush2.msra.mxu0 0.0
  %1072 = vmatprep.subr.mxu0 0.0
  %1073 = vmatpush2.msra.mxu0 0.0
  %1074 = vmatprep.subr.mxu0 0.0
  %1075 = vmatpush2.msra.mxu0 0.0
  %1076 = vmatprep.subr.mxu0 0.0
  %1077 = vmatpush2.msra.mxu0 0.0
  %1078 = vmatprep.subr.mxu0 0.0
  %1079 = vmatpush2.msra.mxu0 0.0
  %1080 = vmatprep.subr.mxu0 0.0
  %1081 = vmatpush2.msra.mxu0 0.0
  %1082 = vmatprep.subr.mxu0 0.0
  %1083 = vmatpush2.msra.mxu0 0.0
  %1084 = vmatprep.subr.mxu0 0.0
  %1085 = vmatpush2.msra.mxu0 0.0
  %1086 = vmatprep.mubr.f32.mxu0 0.0
  %1087 = vmatmul.mubr.f32.gmra.mxu0 %v1020
  %v1088 = vpop.f32.mrf.mxu0
  %v1089 = vadd.f32 0.0, %v1088
  %v1090 = vpop.f32.mrf.mxu0
  %1091 = vdwg.mxu0
  %v1092 = vld [vmem:[%s12] sm:$0xff]
  %v1093 = vld [vmem:[%s12 + $0x8] sm:$0xff]
  %1094 = vxpose.xlu0.b32.start [1/16] %v1092, 128
  %1095 = vxpose.xlu0.b32.cont [2/16] %v1093, 128
  %1096 = vxpose.xlu0.b32.cont [3/16] 0.0, 128
  %1097 = vxpose.xlu0.b32.cont [4/16] 0.0, 128
  %1098 = vxpose.xlu0.b32.cont [5/16] 0.0, 128
  %1099 = vxpose.xlu0.b32.cont [6/16] 0.0, 128
  %1100 = vxpose.xlu0.b32.cont [7/16] 0.0, 128
  %1101 = vxpose.xlu0.b32.cont [8/16] 0.0, 128
  %1102 = vxpose.xlu0.b32.cont [9/16] 0.0, 128
  %1103 = vxpose.xlu0.b32.cont [10/16] 0.0, 128
  %1104 = vxpose.xlu0.b32.cont [11/16] 0.0, 128
  %1105 = vxpose.xlu0.b32.cont [12/16] 0.0, 128
  %1106 = vxpose.xlu0.b32.cont [13/16] 0.0, 128
  %1107 = vxpose.xlu0.b32.cont [14/16] 0.0, 128
  %1108 = vxpose.xlu0.b32.cont [15/16] 0.0, 128
  %1109 = vxpose.xlu0.b32.end [16/16] 0.0, 128
  %v1110 = vpop.trf.xlu0
  %v1111 = vpop.trf.xlu0
  %v1112 = vpop.trf.xlu0
  %v1113 = vpop.trf.xlu0
  %v1114 = vpop.trf.xlu0
  %v1115 = vpop.trf.xlu0
  %v1116 = vpop.trf.xlu0
  %v1117 = vpop.trf.xlu0
  %v1118 = vpop.trf.xlu0
  %v1119 = vpop.trf.xlu0
  %v1120 = vpop.trf.xlu0
  %v1121 = vpop.trf.xlu0
  %v1122 = vpop.trf.xlu0
  %v1123 = vpop.trf.xlu0
  %v1124 = vpop.trf.xlu0
  %v1125 = vpop.trf.xlu0
  %v1127 = vsel %vm66, %v1110, 0
  %1129 = vmatprep.subr.mxu0 0.0
  %1130 = vmatpush1.xpose.msra.mxu0 0.0
  %1131 = vmatprep.subr.mxu0 0.0
  %1132 = vmatpush1.xpose.msra.mxu0 0.0
  %1133 = vmatprep.subr.mxu0 0.0
  %1134 = vmatpush1.xpose.msra.mxu0 0.0
  %1135 = vmatprep.subr.mxu0 0.0
  %1136 = vmatpush1.xpose.msra.mxu0 0.0
  %1137 = vmatprep.subr.mxu0 0.0
  %1138 = vmatpush1.xpose.msra.mxu0 0.0
  %1139 = vmatprep.subr.mxu0 0.0
  %1140 = vmatpush1.xpose.msra.mxu0 0.0
  %1141 = vmatprep.subr.mxu0 0.0
  %1142 = vmatpush1.xpose.msra.mxu0 0.0
  %1143 = vmatprep.subr.mxu0 0.0
  %1144 = vmatpush1.xpose.msra.mxu0 0.0
  %1145 = vmatprep.subr.mxu0 0.0
  %1146 = vmatpush1.xpose.msra.mxu0 0.0
  %1147 = vmatprep.subr.mxu0 0.0
  %1148 = vmatpush1.xpose.msra.mxu0 0.0
  %1149 = vmatprep.subr.mxu0 0.0
  %1150 = vmatpush1.xpose.msra.mxu0 0.0
  %1151 = vmatprep.subr.mxu0 0.0
  %1152 = vmatpush1.xpose.msra.mxu0 0.0
  %1153 = vmatprep.subr.mxu0 0.0
  %1154 = vmatpush1.xpose.msra.mxu0 0.0
  %1155 = vmatprep.subr.mxu0 0.0
  %1156 = vmatpush1.xpose.msra.mxu0 0.0
  %1157 = vmatprep.subr.mxu0 0.0
  %1158 = vmatpush1.xpose.msra.mxu0 0.0
  %1159 = vmatprep.subr.mxu0 0.0
  %1160 = vmatpush1.xpose.msra.mxu0 %v1020
  %1161 = vmatprep.subr.mxu0 0.0
  %1162 = vmatpush2.xpose.msra.mxu0 0.0
  %1163 = vmatprep.subr.mxu0 0.0
  %1164 = vmatpush2.xpose.msra.mxu0 0.0
  %1165 = vmatprep.subr.mxu0 0.0
  %1166 = vmatpush2.xpose.msra.mxu0 0.0
  %1167 = vmatprep.subr.mxu0 0.0
  %1168 = vmatpush2.xpose.msra.mxu0 0.0
  %1169 = vmatprep.subr.mxu0 0.0
  %1170 = vmatpush2.xpose.msra.mxu0 0.0
  %1171 = vmatprep.subr.mxu0 0.0
  %1172 = vmatpush2.xpose.msra.mxu0 0.0
  %1173 = vmatprep.subr.mxu0 0.0
  %1174 = vmatpush2.xpose.msra.mxu0 0.0
  %1175 = vmatprep.subr.mxu0 0.0
  %1176 = vmatpush2.xpose.msra.mxu0 0.0
  %1177 = vmatprep.subr.mxu0 0.0
  %1178 = vmatpush2.xpose.msra.mxu0 0.0
  %1179 = vmatprep.subr.mxu0 0.0
  %1180 = vmatpush2.xpose.msra.mxu0 0.0
  %1181 = vmatprep.subr.mxu0 0.0
  %1182 = vmatpush2.xpose.msra.mxu0 0.0
  %1183 = vmatprep.subr.mxu0 0.0
  %1184 = vmatpush2.xpose.msra.mxu0 0.0
  %1185 = vmatprep.subr.mxu0 0.0
  %1186 = vmatpush2.xpose.msra.mxu0 0.0
  %1187 = vmatprep.subr.mxu0 0.0
  %1188 = vmatpush2.xpose.msra.mxu0 0.0
  %1189 = vmatprep.subr.mxu0 0.0
  %1190 = vmatpush2.xpose.msra.mxu0 0.0
  %1191 = vmatprep.subr.mxu0 0.0
  %1192 = vmatpush2.xpose.msra.mxu0 0.0
  %1193 = vmatprep.mubr.f32.mxu0 0.0
  %1194 = vmatmul.mubr.f32.gmra.mxu0 %v1127
  %v1195 = vpop.f32.mrf.mxu0
  %v1196 = vadd.f32 0.0, %v1195
  %v1197 = vpop.f32.mrf.mxu0
  %1198 = vdwg.mxu0
  %1200 = vset.pattern.permute.xlu0 0
  %1201 = vperm.xlu0 %1200, %v1089
  %v1202 = vpop.permute.xlu0 %1201
  %v1204 = vlaneseq
  %v1205 = vshrl.u32 %v1204, 7
  %v1206 = vsub.s32 0, %v1205
  %v1207 = vrot.slane %v1196, %v1206
  %v1208 = vadd.f32 %v1202, %v1207
  %vm1209 = vcmp.ge.f32.partialorder %v1208, 0.0
  %v1210 = vmul.f32 %v1208, 0.2
  %v1211 = vsel %vm1209, %v1208, %v1210
  %v1212 = vsel %vm49, %v1211, -1e+30
  %v1213 = vsel %vm306, %v1212, -inf
  %v1214 = vrot.slane %v1213, 4
  %v1215 = vmax.f32 %v1213, %v1214
  %v1216 = vrot.slane %v1215, 2
  %v1217 = vmax.f32 %v1215, %v1216
  %v1218 = vrot.slane %v1217, 1
  %v1219 = vmax.f32 %v1217, %v1218
  %v1220 = vsub.f32 %v1212, %v1219
  %v1221 = vmul.f32 %v1220, 1.442695
  %v1222 = vpow.pop %v1221
  %v1223 = vsel %vm306, %v1222, 0.0
  %v1224 = vrot.slane %v1223, 4
  %v1225 = vadd.f32 %v1223, %v1224
  %v1226 = vrot.slane %v1225, 2
  %v1227 = vadd.f32 %v1225, %v1226
  %v1228 = vrot.slane %v1227, 1
  %v1229 = vadd.f32 %v1227, %v1228
  %v1230 = vmax.f32 %v1229, 1e-30
  %v1231 = vrcp.pop %v1230
  %v1232 = vmul.f32 %v1222, %v1231
  %v1233 = vpack.c.bf16 %v1232, %v1232
  %v1234 = vpack.c.bf16 %v1012, %v1012
  %1235 = vxpose.xlu0.c.b16.start [1/8] %v1233, 128
  %1236 = vxpose.xlu0.c.b16.cont [2/8] 0, 128
  %1237 = vxpose.xlu0.c.b16.cont [3/8] 0, 128
  %1238 = vxpose.xlu0.c.b16.cont [4/8] 0, 128
  %1239 = vxpose.xlu0.c.b16.cont [5/8] 0, 128
  %1240 = vxpose.xlu0.c.b16.cont [6/8] 0, 128
  %1241 = vxpose.xlu0.c.b16.cont [7/8] 0, 128
  %1242 = vxpose.xlu0.c.b16.end [8/8] 0, 128
  %v1243 = vpop.trf.xlu0
  %v1244 = vpop.trf.xlu0
  %v1245 = vpop.trf.xlu0
  %v1246 = vpop.trf.xlu0
  %v1247 = vpop.trf.xlu0
  %v1248 = vpop.trf.xlu0
  %v1249 = vpop.trf.xlu0
  %v1250 = vpop.trf.xlu0
  %v1252 = vsel %vm306, %v1243, 0
  %v1255 = vsel %vm348, %v1234, 0
  %1257 = vmatprep.subr.bf16.mxu0 0
  %1258 = vmatpush1.bf16.msra.mxu0 0
  %1259 = vmatprep.subr.bf16.mxu0 0
  %1260 = vmatpush1.bf16.msra.mxu0 0
  %1261 = vmatprep.subr.bf16.mxu0 0
  %1262 = vmatpush1.bf16.msra.mxu0 0
  %1263 = vmatprep.subr.bf16.mxu0 0
  %1264 = vmatpush1.bf16.msra.mxu0 0
  %1265 = vmatprep.subr.bf16.mxu0 0
  %1266 = vmatpush1.bf16.msra.mxu0 0
  %1267 = vmatprep.subr.bf16.mxu0 0
  %1268 = vmatpush1.bf16.msra.mxu0 0
  %1269 = vmatprep.subr.bf16.mxu0 0
  %1270 = vmatpush1.bf16.msra.mxu0 0
  %1271 = vmatprep.subr.bf16.mxu0 0
  %1272 = vmatpush1.bf16.msra.mxu0 %v1255
  %1273 = vmatprep.subr.bf16.mxu0 0
  %1274 = vmatpush2.bf16.msra.mxu0 0
  %1275 = vmatprep.subr.bf16.mxu0 0
  %1276 = vmatpush2.bf16.msra.mxu0 0
  %1277 = vmatprep.subr.bf16.mxu0 0
  %1278 = vmatpush2.bf16.msra.mxu0 0
  %1279 = vmatprep.subr.bf16.mxu0 0
  %1280 = vmatpush2.bf16.msra.mxu0 0
  %1281 = vmatprep.subr.bf16.mxu0 0
  %1282 = vmatpush2.bf16.msra.mxu0 0
  %1283 = vmatprep.subr.bf16.mxu0 0
  %1284 = vmatpush2.bf16.msra.mxu0 0
  %1285 = vmatprep.subr.bf16.mxu0 0
  %1286 = vmatpush2.bf16.msra.mxu0 0
  %1287 = vmatprep.subr.bf16.mxu0 0
  %1288 = vmatpush2.bf16.msra.mxu0 0
  %1289 = vmatprep.mubr.bf16.mxu0 0
  %1290 = vmatmul.mubr.bf16.gmra.mxu0 %v1252
  %v1291 = vpop.f32.mrf.mxu0
  %v1292 = vadd.f32 0.0, %v1291
  %v1293 = vpop.f32.mrf.mxu0
  %v1294 = vpop.f32.mrf.mxu0
  %v1295 = vpop.f32.mrf.mxu0
  %1296 = vdwg.mxu0
  %v1298 = vsel %vm306, %v50, 0
  %v1301 = vsel %vm306, %v51, 0
  %v1304 = vsel %vm306, %v52, 0
  %1306 = vmatprep.subr.mxu0 0.0
  %1307 = vmatpush1.msra.mxu0 0.0
  %1308 = vmatprep.subr.mxu0 0.0
  %1309 = vmatpush1.msra.mxu0 0.0
  %1310 = vmatprep.subr.mxu0 0.0
  %1311 = vmatpush1.msra.mxu0 0.0
  %1312 = vmatprep.subr.mxu0 0.0
  %1313 = vmatpush1.msra.mxu0 0.0
  %1314 = vmatprep.subr.mxu0 0.0
  %1315 = vmatpush1.msra.mxu0 0.0
  %1316 = vmatprep.subr.mxu0 0.0
  %1317 = vmatpush1.msra.mxu0 0.0
  %1318 = vmatprep.subr.mxu0 0.0
  %1319 = vmatpush1.msra.mxu0 0.0
  %1320 = vmatprep.subr.mxu0 0.0
  %1321 = vmatpush1.msra.mxu0 0.0
  %1322 = vmatprep.subr.mxu0 0.0
  %1323 = vmatpush1.msra.mxu0 0.0
  %1324 = vmatprep.subr.mxu0 0.0
  %1325 = vmatpush1.msra.mxu0 0.0
  %1326 = vmatprep.subr.mxu0 0.0
  %1327 = vmatpush1.msra.mxu0 0.0
  %1328 = vmatprep.subr.mxu0 0.0
  %1329 = vmatpush1.msra.mxu0 0.0
  %1330 = vmatprep.subr.mxu0 0.0
  %1331 = vmatpush1.msra.mxu0 0.0
  %1332 = vmatprep.subr.mxu0 0.0
  %1333 = vmatpush1.msra.mxu0 0.0
  %1334 = vmatprep.subr.mxu0 0.0
  %1335 = vmatpush1.msra.mxu0 0.0
  %1336 = vmatprep.subr.mxu0 0.0
  %1337 = vmatpush1.msra.mxu0 %v1232
  %1338 = vmatprep.subr.mxu0 0.0
  %1339 = vmatpush2.msra.mxu0 0.0
  %1340 = vmatprep.subr.mxu0 0.0
  %1341 = vmatpush2.msra.mxu0 0.0
  %1342 = vmatprep.subr.mxu0 0.0
  %1343 = vmatpush2.msra.mxu0 0.0
  %1344 = vmatprep.subr.mxu0 0.0
  %1345 = vmatpush2.msra.mxu0 0.0
  %1346 = vmatprep.subr.mxu0 0.0
  %1347 = vmatpush2.msra.mxu0 0.0
  %1348 = vmatprep.subr.mxu0 0.0
  %1349 = vmatpush2.msra.mxu0 0.0
  %1350 = vmatprep.subr.mxu0 0.0
  %1351 = vmatpush2.msra.mxu0 0.0
  %1352 = vmatprep.subr.mxu0 0.0
  %1353 = vmatpush2.msra.mxu0 0.0
  %1354 = vmatprep.subr.mxu0 0.0
  %1355 = vmatpush2.msra.mxu0 0.0
  %1356 = vmatprep.subr.mxu0 0.0
  %1357 = vmatpush2.msra.mxu0 0.0
  %1358 = vmatprep.subr.mxu0 0.0
  %1359 = vmatpush2.msra.mxu0 0.0
  %1360 = vmatprep.subr.mxu0 0.0
  %1361 = vmatpush2.msra.mxu0 0.0
  %1362 = vmatprep.subr.mxu0 0.0
  %1363 = vmatpush2.msra.mxu0 0.0
  %1364 = vmatprep.subr.mxu0 0.0
  %1365 = vmatpush2.msra.mxu0 0.0
  %1366 = vmatprep.subr.mxu0 0.0
  %1367 = vmatpush2.msra.mxu0 0.0
  %1368 = vmatprep.subr.mxu0 0.0
  %1369 = vmatpush2.msra.mxu0 0.0
  %1370 = vmatprep.mubr.f32.mxu0 0.0
  %1371 = vmatmul.mubr.f32.gmra.mxu0 %v1298
  %v1372 = vpop.f32.mrf.mxu0
  %v1373 = vadd.f32 0.0, %v1372
  %v1374 = vpop.f32.mrf.mxu0
  %1375 = vmatprep.mubr.f32.mxu0 0.0
  %1376 = vmatmul.mubr.f32.gmra.mxu0 %v1301
  %v1377 = vpop.f32.mrf.mxu0
  %v1378 = vadd.f32 0.0, %v1377
  %v1379 = vpop.f32.mrf.mxu0
  %1380 = vmatprep.mubr.f32.mxu0 0.0
  %1381 = vmatmul.mubr.f32.gmra.mxu0 %v1304
  %v1382 = vpop.f32.mrf.mxu0
  %v1383 = vadd.f32 0.0, %v1382
  %v1384 = vpop.f32.mrf.mxu0
  %1385 = vdwg.mxu0
  %v1386 = vmul.f32 %v1373, %v53
  %v1387 = vmul.f32 %v1378, %v54
  %v1388 = vmul.f32 %v1383, %v55
  %v1389 = vsel %vm306, %v1386, 0.0
  %1390 = vadd.xlane.f32.xlu0 %v1389
  %v1391 = vpop.xlane.xlu0 %1390
  %v1392 = vsel %vm306, %v1387, 0.0
  %1393 = vadd.xlane.f32.xlu0 %v1392
  %v1394 = vpop.xlane.xlu0 %1393
  %v1395 = vsel %vm306, %v1388, 0.0
  %1396 = vadd.xlane.f32.xlu0 %v1395
  %v1397 = vpop.xlane.xlu0 %1396
  %vm1398 = vcmask 31744
  %1399 = vst.msk [vmem:[%s13] sm:$0xff] %vm1398, %v1292
  %1400 = vst.msk [vmem:[%s14] sm:$0xff] %vm963, %v1391
  %1401 = vst.msk [vmem:[%s14 + $0x8] sm:$0xff] %vm963, %v1394
  %1402 = vst.msk [vmem:[%s14 + $0x10] sm:$0xff] %vm963, %v1397
  // Predicated region
  $region54: #{tpu_custom_call.1} parent=0 // pred_check
    _
  $region55: #{tpu_custom_call.1} parent=0 // pred_check_branch
    %1404 = sbr.rel (0) target = $region57
  $region56: #{tpu_custom_call.1} parent=0 // pred_region
    _
  $region57: #{tpu_custom_call.1} parent=0 // pred_fallthru
    _
  // Predicated region
  $region58: #{tpu_custom_call.1} parent=0 // pred_check
    _
  $region59: #{tpu_custom_call.1} parent=0 // pred_check_branch
    %1406 = sbr.rel (0) target = $region61
  $region60: #{tpu_custom_call.1} parent=0 // pred_region
    _
  $region61: #{tpu_custom_call.1} parent=0 // pred_fallthru
    _
  // Predicated region
  $region62: #{tpu_custom_call.1} parent=0 // pred_check
    _
  $region63: #{tpu_custom_call.1} parent=0 // pred_check_branch
    %1408 = sbr.rel (0) target = $region65
  $region64: #{tpu_custom_call.1} parent=0 // pred_region
    _
  $region65: #{tpu_custom_call.1} parent=0 // pred_fallthru
    _
  // Predicated region
  $region66: #{tpu_custom_call.1} parent=0 // pred_check
    _
  $region67: #{tpu_custom_call.1} parent=0 // pred_check_branch
    %1410 = sbr.rel (0) target = $region69
  $region68: #{tpu_custom_call.1} parent=0 // pred_region
    _
  $region69: #{tpu_custom_call.1} parent=0 // pred_fallthru
    _
  // Predicated region
  $region70: #{tpu_custom_call.1} parent=0 // pred_check
    _
  $region71: #{tpu_custom_call.1} parent=0 // pred_check_branch
    %1412 = sbr.rel (0) target = $region73
  $region72: #{tpu_custom_call.1} parent=0 // pred_region
    _
  $region73: #{tpu_custom_call.1} parent=0 // pred_fallthru
    _
  // Predicated region
  $region74: #{tpu_custom_call.1} parent=0 // pred_check
    _
  $region75: #{tpu_custom_call.1} parent=0 // pred_check_branch
    %1414 = sbr.rel (0) target = $region77
  $region76: #{tpu_custom_call.1} parent=0 // pred_region
    _
  $region77: #{tpu_custom_call.1} parent=0 // pred_fallthru
    _

</llo_original>
